<compile_context>
chip_gen: v6e
topology: v6e:2x2x1
jax: 0.10.0
libtpu: 0.0.40
codegen_flags: <defaults>
</compile_context>

<pallas_src>
import functools
import math

import jax
import jax.numpy as jnp
from jax.experimental import pallas as pl
from jax.experimental.pallas import tpu as pltpu

N_DIM = 32
N_HEADS = 4
HEAD_SIZE = N_DIM // N_HEADS
NEG_INF = -1e30   # finite mask value; exp underflows to exactly 0 after max-sub


def _fast_reciprocal(x):
    # EUP approximate reciprocal + one Newton-Raphson refinement step:
    # relative error ~eps^2 (fp32-exact for practical purposes) while the
    # expensive op rides the otherwise-idle EUP slot instead of a VALU divide.
    r = pl.reciprocal(x, approx=True)
    return r * (2.0 - x * r)


def _layernorm(x, alpha, bias):
    # torch: mean over last dim, unbiased std (/(C-1)), eps added to std.
    c = x.shape[-1]
    mean = jnp.mean(x, axis=-1, keepdims=True)
    var = jnp.sum((x - mean) ** 2, axis=-1, keepdims=True) / (c - 1)
    inv = _fast_reciprocal(jnp.sqrt(var) + 1e-6)
    return alpha * (x - mean) * inv + bias


def block_kernel(x_ref,
                 ln1_a_ref, ln1_b_ref,
                 wqkv_ref, bqkv_ref,
                 wp_ref, bp_ref,
                 ln2_a_ref, ln2_b_ref,
                 w1_ref, b1_ref, w2_ref, b2_ref,
                 attn_bias_ref,
                 o_ref, *, seq_len):
    m, c = x_ref.shape            # m = batch_block * seq_len
    t = seq_len
    bblk = m // t

    x = x_ref[...]                                   # (M, C) -- no load-path reshape

    # ---- LayerNorm 1 ----
    h = _layernorm(x, ln1_a_ref[0], ln1_b_ref[0])

    # ---- fused QKV projection (attention scale pre-folded into Q columns) ----
    qkv = jnp.dot(h, wqkv_ref[...], preferred_element_type=jnp.float32) + bqkv_ref[0]
    qkv3 = qkv.reshape(bblk, t, 3 * c)               # leading split only (last dim kept)

    # ---- gather heads onto a fused (head, seq) axis: rows ordered (h, t) ----
    # Aligned 8-lane slices + tile-aligned sublane concats; no transposes.
    q2 = jnp.concatenate(
        [qkv3[:, :, hh * HEAD_SIZE:(hh + 1) * HEAD_SIZE]
         for hh in range(N_HEADS)], axis=1)                          # (B, H*T, D)
    k2 = jnp.concatenate(
        [qkv3[:, :, c + hh * HEAD_SIZE:c + (hh + 1) * HEAD_SIZE]
         for hh in range(N_HEADS)], axis=1)
    v2 = jnp.concatenate(
        [qkv3[:, :, 2 * c + hh * HEAD_SIZE:2 * c + (hh + 1) * HEAD_SIZE]
         for hh in range(N_HEADS)], axis=1)

    # ---- attention: one batched score matmul + one softmax + one PV matmul ----
    # Per-batch scores are (H*T, H*T); cross-head entries are killed by the
    # additive block-diagonal causal bias (their exp underflows to exactly 0),
    # so the softmax / PV matmul reproduce per-head attention exactly.
    s = jnp.einsum('bmd,bnd->bmn', q2, k2, preferred_element_type=jnp.float32)
    s = s + attn_bias_ref[...]                       # (1, H*T, H*T) additive bias
    mx = jnp.max(s, axis=-1, keepdims=True)
    e = jnp.exp(s - mx)
    p = e * _fast_reciprocal(jnp.sum(e, axis=-1, keepdims=True))
    z2 = jnp.einsum('bmn,bnd->bmd', p, v2, preferred_element_type=jnp.float32)

    # ---- back to (M, C) feature layout: sublane slices + one lane concat ----
    z = jnp.concatenate(
        [z2[:, hh * t:(hh + 1) * t, :] for hh in range(N_HEADS)], axis=-1)  # (B, T, C)
    z = z.reshape(m, c)                              # leading merge only

    # ---- output projection + residual ----
    x = x + jnp.dot(z, wp_ref[...], preferred_element_type=jnp.float32) + bp_ref[0]

    # ---- LayerNorm 2 + FeedForward + residual ----
    h2 = _layernorm(x, ln2_a_ref[0], ln2_b_ref[0])
    f = jnp.dot(h2, w1_ref[...], preferred_element_type=jnp.float32) + b1_ref[0]
    f = jnp.maximum(f, 0.0)
    f = jnp.dot(f, w2_ref[...], preferred_element_type=jnp.float32) + b2_ref[0]

    o_ref[...] = x + f                               # (M, C) -- no store-path reshape
    # TODO(synk): for large B*T present the output lane-dense (view as
    # (M*C/128, 128)) so final stores are unmasked vst; irrelevant at this
    # size, largest payoff on v5e (single vst slot) if the kernel is scaled.


def _default_batch_block(b):
    # v5e/v6e: 1 TensorCore/chip -> one big grid step amortizes the ~0.35us
    # per-step overhead.  v7x: 2 TensorCores -> need >=2 'parallel' steps.
    try:
        kind = jax.devices()[0].device_kind.lower()
    except Exception:
        kind = ""
    if "v7" in kind and b % 2 == 0:
        return b // 2
    return b


def block_forward(x, params, batch_block=None):
    """x: (B, T, C) fp32.  params: dict of pre-transposed weights / biases."""
    b, t, c = x.shape
    assert c == N_DIM
    if batch_block is None:
        batch_block = _default_batch_block(b)
    assert b % batch_block == 0
    grid = (b // batch_block,)
    rows = batch_block * t

    # Fuse Q/K/V weights & biases into one (C, 3C) projection and fold the
    # 1/sqrt(head_size) attention scale into the Q columns.  (Runs in the
    # wrapper; hoist / jit-constant-fold in the caller if params are static.)
    scale = 1.0 / math.sqrt(HEAD_SIZE)
    wqkv_t = jnp.concatenate(
        [params["wq_t"] * scale, params["wk_t"], params["wv_t"]], axis=1)   # (32, 96)
    bqkv = jnp.concatenate(
        [params["bq"] * scale, params["bk"], params["bv"]], axis=1)          # (1, 96)

    # Additive causal + same-head mask over the fused (head, seq) attention axis.
    th = N_HEADS * t
    idx = jnp.arange(th)
    h_idx, t_idx = idx // t, idx % t
    allowed = (h_idx[:, None] == h_idx[None, :]) & (t_idx[:, None] >= t_idx[None, :])
    attn_bias = jnp.where(allowed, 0.0, NEG_INF).astype(jnp.float32)[None]   # (1, TH, TH)

    param_list = [
        params["ln1_a"], params["ln1_b"],
        wqkv_t, bqkv,
        params["wp_t"], params["bp"],
        params["ln2_a"], params["ln2_b"],
        params["w1_t"], params["b1"], params["w2_t"], params["b2"],
        attn_bias,
    ]

    def full_spec(p):
        nd = p.ndim
        # replicate the full (small) parameter array to every grid step
        return pl.BlockSpec(p.shape, lambda i, _nd=nd: (0,) * _nd)

    in_specs = [pl.BlockSpec((rows, c), lambda i: (i, 0))] + \
               [full_spec(p) for p in param_list]

    kernel = functools.partial(block_kernel, seq_len=t)

    # (B,T,C)<->(B*T,C) reshapes live out here (free XLA metadata ops), so the
    # kernel loads/stores plain 2-D slabs.
    x2 = x.reshape(b * t, c)

    out2 = pl.pallas_call(
        kernel,
        out_shape=jax.ShapeDtypeStruct((b * t, c), jnp.float32),
        grid_spec=pltpu.PrefetchScalarGridSpec(
            num_scalar_prefetch=0,
            grid=grid,
            in_specs=in_specs,
            out_specs=pl.BlockSpec((rows, c), lambda i: (i, 0)),
        ),
        compiler_params=pltpu.CompilerParams(
            dimension_semantics=("parallel",)),
        # NOTE: at large B*T, re-derive batch_block against the scoped-VMEM
        # budget (double-buffered x/out slabs + qkv / (H*T)^2 scores / 4C FFN
        # temporaries) and set vmem_limit_bytes explicitly (v7x: 64 MiB phys).
    )(x2, *param_list)

    return out2.reshape(b, t, c)


# ------------------------- pure-JAX reference -------------------------
def block_reference(x, params):
    def ln(x, a, b):
        c = x.shape[-1]
        mean = jnp.mean(x, axis=-1, keepdims=True)
        var = jnp.sum((x - mean) ** 2, axis=-1, keepdims=True) / (c - 1)
        return a * (x - mean) / (jnp.sqrt(var) + 1e-6) + b

    bsz, t, c = x.shape
    h = ln(x, params["ln1_a"][0], params["ln1_b"][0])
    q = h @ params["wq_t"] + params["bq"][0]
    k = h @ params["wk_t"] + params["bk"][0]
    v = h @ params["wv_t"] + params["bv"][0]
    q = q.reshape(bsz, t, N_HEADS, HEAD_SIZE).transpose(0, 2, 1, 3)
    k = k.reshape(bsz, t, N_HEADS, HEAD_SIZE).transpose(0, 2, 1, 3)
    v = v.reshape(bsz, t, N_HEADS, HEAD_SIZE).transpose(0, 2, 1, 3)
    w = (q @ jnp.swapaxes(k, -2, -1)) / math.sqrt(HEAD_SIZE)
    mask = jnp.tril(jnp.ones((t, t), bool))
    w = jnp.where(mask, w, -jnp.inf)
    w = jax.nn.softmax(w, axis=-1)
    z = (w @ v).transpose(0, 2, 1, 3).reshape(bsz, t, c)
    z = z @ params["wp_t"] + params["bp"][0]
    x = x + z
    h2 = ln(x, params["ln2_a"][0], params["ln2_b"][0])
    f = jnp.maximum(h2 @ params["w1_t"] + params["b1"][0], 0.0)
    f = f @ params["w2_t"] + params["b2"][0]
    return x + f


def init_params(key):
    ks = jax.random.split(key, 12)

    def lin(kw, kb, fan_in, fan_out):
        # PyTorch-style uniform init, deterministic
        bound = 1.0 / math.sqrt(fan_in)
        w = jax.random.uniform(kw, (fan_out, fan_in), jnp.float32, -bound, bound)
        b = jax.random.uniform(kb, (fan_out,), jnp.float32, -bound, bound)
        return w.T, b.reshape(1, fan_out)   # pre-transposed weight (in, out)

    wq_t, bq = lin(ks[0], ks[1], N_DIM, N_DIM)
    wk_t, bk = lin(ks[2], ks[3], N_DIM, N_DIM)
    wv_t, bv = lin(ks[4], ks[5], N_DIM, N_DIM)
    wp_t, bp = lin(ks[6], ks[7], N_DIM, N_DIM)
    w1_t, b1 = lin(ks[8], ks[9], N_DIM, 4 * N_DIM)
    w2_t, b2 = lin(ks[10], ks[11], 4 * N_DIM, N_DIM)

    return dict(
        ln1_a=jnp.ones((1, N_DIM), jnp.float32),
        ln1_b=jnp.zeros((1, N_DIM), jnp.float32),
        ln2_a=jnp.ones((1, N_DIM), jnp.float32),
        ln2_b=jnp.zeros((1, N_DIM), jnp.float32),
        wq_t=wq_t, bq=bq, wk_t=wk_t, bk=bk, wv_t=wv_t, bv=bv,
        wp_t=wp_t, bp=bp, w1_t=w1_t, b1=b1, w2_t=w2_t, b2=b2,
    )


if __name__ == "__main__":
    key = jax.random.PRNGKey(0)
    k_x, k_p = jax.random.split(key)

    B, T = 2, 8          # max_len = 8
    x = jax.random.normal(k_x, (B, T, N_DIM), jnp.float32)
    params = init_params(k_p)

    out = jax.block_until_ready(block_forward(x, params))
    ref = block_reference(x, params)

    assert out.shape == (B, T, N_DIM)
    assert jnp.allclose(out, ref, atol=1e-4, rtol=1e-4), "mismatch vs reference"

    print("KERNEL_OK")
</pallas_src>

<mosaic_0001>
module attributes {stable_mosaic.version = 11 : i64} {
  func.func @block_kernel(%arg0: i32, %arg1: memref<16x32xf32, #tpu.memory_space<vmem>>, %arg2: memref<1x32xf32, #tpu.memory_space<vmem>>, %arg3: memref<1x32xf32, #tpu.memory_space<vmem>>, %arg4: memref<32x96xf32, #tpu.memory_space<vmem>>, %arg5: memref<1x96xf32, #tpu.memory_space<vmem>>, %arg6: memref<32x32xf32, #tpu.memory_space<vmem>>, %arg7: memref<1x32xf32, #tpu.memory_space<vmem>>, %arg8: memref<1x32xf32, #tpu.memory_space<vmem>>, %arg9: memref<1x32xf32, #tpu.memory_space<vmem>>, %arg10: memref<32x128xf32, #tpu.memory_space<vmem>>, %arg11: memref<1x128xf32, #tpu.memory_space<vmem>>, %arg12: memref<128x32xf32, #tpu.memory_space<vmem>>, %arg13: memref<1x32xf32, #tpu.memory_space<vmem>>, %arg14: memref<1x32x32xf32, #tpu.memory_space<vmem>>, %arg15: memref<16x32xf32, #tpu.memory_space<vmem>>) attributes {dimension_semantics = [#tpu.dimension_semantics<parallel>], iteration_bounds = array<i64: 1>, scalar_prefetch = 0 : i64, scratch_operands = 0 : i64, tpu.core_type = #tpu.core_type<tc>, window_params = [{transform_indices = @transform_0, window_bounds = array<i64: 16, 32>}, {pipeline_mode = #tpu.pipeline_mode<synchronous>, transform_indices = @transform_1, window_bounds = array<i64: 1, 32>}, {pipeline_mode = #tpu.pipeline_mode<synchronous>, transform_indices = @transform_2, window_bounds = array<i64: 1, 32>}, {pipeline_mode = #tpu.pipeline_mode<synchronous>, transform_indices = @transform_3, window_bounds = array<i64: 32, 96>}, {pipeline_mode = #tpu.pipeline_mode<synchronous>, transform_indices = @transform_4, window_bounds = array<i64: 1, 96>}, {pipeline_mode = #tpu.pipeline_mode<synchronous>, transform_indices = @transform_5, window_bounds = array<i64: 32, 32>}, {pipeline_mode = #tpu.pipeline_mode<synchronous>, transform_indices = @transform_6, window_bounds = array<i64: 1, 32>}, {pipeline_mode = #tpu.pipeline_mode<synchronous>, transform_indices = @transform_7, window_bounds = array<i64: 1, 32>}, {pipeline_mode = #tpu.pipeline_mode<synchronous>, transform_indices = @transform_8, window_bounds = array<i64: 1, 32>}, {pipeline_mode = #tpu.pipeline_mode<synchronous>, transform_indices = @transform_9, window_bounds = array<i64: 32, 128>}, {pipeline_mode = #tpu.pipeline_mode<synchronous>, transform_indices = @transform_10, window_bounds = array<i64: 1, 128>}, {pipeline_mode = #tpu.pipeline_mode<synchronous>, transform_indices = @transform_11, window_bounds = array<i64: 128, 32>}, {pipeline_mode = #tpu.pipeline_mode<synchronous>, transform_indices = @transform_12, window_bounds = array<i64: 1, 32>}, {pipeline_mode = #tpu.pipeline_mode<synchronous>, transform_indices = @transform_13, window_bounds = array<i64: 1, 32, 32>}, {transform_indices = @transform_14, window_bounds = array<i64: 16, 32>}]} {
    %c0 = arith.constant 0 : index
    %c0_0 = arith.constant 0 : index
    %0 = vector.load %arg1[%c0, %c0_0] : memref<16x32xf32, #tpu.memory_space<vmem>>, vector<16x32xf32>
    %c0_1 = arith.constant 0 : index
    %c0_2 = arith.constant 0 : index
    %1 = vector.load %arg2[%c0_1, %c0_2] : memref<1x32xf32, #tpu.memory_space<vmem>>, vector<1x32xf32>
    %2 = vector.shape_cast %1 : vector<1x32xf32> to vector<32xf32>
    %c0_3 = arith.constant 0 : index
    %c0_4 = arith.constant 0 : index
    %3 = vector.load %arg3[%c0_3, %c0_4] : memref<1x32xf32, #tpu.memory_space<vmem>>, vector<1x32xf32>
    %4 = vector.shape_cast %3 : vector<1x32xf32> to vector<32xf32>
    %cst = arith.constant dense<0.000000e+00> : vector<16xf32>
    %5 = vector.multi_reduction <add>, %0, %cst [1] : vector<16x32xf32> to vector<16xf32>
    %6 = vector.shape_cast %5 : vector<16xf32> to vector<16x1xf32>
    %cst_5 = arith.constant 3.200000e+01 : f32
    %7 = vector.broadcast %cst_5 : f32 to vector<16x1xf32>
    %8 = arith.divf %6, %7 : vector<16x1xf32>
    %9 = vector.broadcast %8 : vector<16x1xf32> to vector<16x32xf32>
    %10 = arith.subf %0, %9 : vector<16x32xf32>
    %11 = arith.mulf %10, %10 : vector<16x32xf32>
    %cst_6 = arith.constant dense<0.000000e+00> : vector<16xf32>
    %12 = vector.multi_reduction <add>, %11, %cst_6 [1] : vector<16x32xf32> to vector<16xf32>
    %13 = vector.shape_cast %12 : vector<16xf32> to vector<16x1xf32>
    %cst_7 = arith.constant 3.100000e+01 : f32
    %14 = vector.broadcast %cst_7 : f32 to vector<16x1xf32>
    %15 = arith.divf %13, %14 : vector<16x1xf32>
    %16 = math.sqrt %15 : vector<16x1xf32>
    %cst_8 = arith.constant 9.99999997E-7 : f32
    %17 = vector.broadcast %cst_8 : f32 to vector<16x1xf32>
    %18 = arith.addf %16, %17 : vector<16x1xf32>
    %19 = tpu.reciprocal %18 {approx = true} : vector<16x1xf32> -> vector<16x1xf32>
    %20 = arith.mulf %18, %19 : vector<16x1xf32>
    %cst_9 = arith.constant 2.000000e+00 : f32
    %21 = vector.broadcast %cst_9 : f32 to vector<16x1xf32>
    %22 = arith.subf %21, %20 : vector<16x1xf32>
    %23 = arith.mulf %19, %22 : vector<16x1xf32>
    %24 = vector.broadcast %8 : vector<16x1xf32> to vector<16x32xf32>
    %25 = arith.subf %0, %24 : vector<16x32xf32>
    %26 = vector.shape_cast %2 : vector<32xf32> to vector<1x32xf32>
    %27 = vector.broadcast %26 : vector<1x32xf32> to vector<16x32xf32>
    %28 = arith.mulf %27, %25 : vector<16x32xf32>
    %29 = vector.broadcast %23 : vector<16x1xf32> to vector<16x32xf32>
    %30 = arith.mulf %28, %29 : vector<16x32xf32>
    %31 = vector.shape_cast %4 : vector<32xf32> to vector<1x32xf32>
    %32 = vector.broadcast %31 : vector<1x32xf32> to vector<16x32xf32>
    %33 = arith.addf %30, %32 : vector<16x32xf32>
    %c0_10 = arith.constant 0 : index
    %c0_11 = arith.constant 0 : index
    %34 = vector.load %arg4[%c0_10, %c0_11] : memref<32x96xf32, #tpu.memory_space<vmem>>, vector<32x96xf32>
    %cst_12 = arith.constant dense<0.000000e+00> : vector<16x96xf32>
    %35 = tpu.matmul %33, %34, %cst_12 {dimension_numbers = #tpu.dot_dimension_numbers<[1], [0], [0], [1], [0, 0, 1, 1], [], []>} : vector<16x32xf32>, vector<32x96xf32>, vector<16x96xf32> -> vector<16x96xf32>
    %c0_13 = arith.constant 0 : index
    %c0_14 = arith.constant 0 : index
    %36 = vector.load %arg5[%c0_13, %c0_14] : memref<1x96xf32, #tpu.memory_space<vmem>>, vector<1x96xf32>
    %37 = vector.shape_cast %36 : vector<1x96xf32> to vector<96xf32>
    %38 = vector.shape_cast %37 : vector<96xf32> to vector<1x96xf32>
    %39 = vector.broadcast %38 : vector<1x96xf32> to vector<16x96xf32>
    %40 = arith.addf %35, %39 : vector<16x96xf32>
    %41 = vector.shape_cast %40 : vector<16x96xf32> to vector<2x8x96xf32>
    %42 = vector.extract_strided_slice %41 {offsets = [0, 0, 0], sizes = [2, 8, 8], strides = [1, 1, 1]} : vector<2x8x96xf32> to vector<2x8x8xf32>
    %43 = vector.extract_strided_slice %41 {offsets = [0, 0, 8], sizes = [2, 8, 8], strides = [1, 1, 1]} : vector<2x8x96xf32> to vector<2x8x8xf32>
    %44 = vector.extract_strided_slice %41 {offsets = [0, 0, 16], sizes = [2, 8, 8], strides = [1, 1, 1]} : vector<2x8x96xf32> to vector<2x8x8xf32>
    %45 = vector.extract_strided_slice %41 {offsets = [0, 0, 24], sizes = [2, 8, 8], strides = [1, 1, 1]} : vector<2x8x96xf32> to vector<2x8x8xf32>
    %46 = tpu.concatenate %42, %43, %44, %45 in 1 : vector<2x8x8xf32>, vector<2x8x8xf32>, vector<2x8x8xf32>, vector<2x8x8xf32> -> vector<2x32x8xf32>
    %47 = vector.extract_strided_slice %41 {offsets = [0, 0, 32], sizes = [2, 8, 8], strides = [1, 1, 1]} : vector<2x8x96xf32> to vector<2x8x8xf32>
    %48 = vector.extract_strided_slice %41 {offsets = [0, 0, 40], sizes = [2, 8, 8], strides = [1, 1, 1]} : vector<2x8x96xf32> to vector<2x8x8xf32>
    %49 = vector.extract_strided_slice %41 {offsets = [0, 0, 48], sizes = [2, 8, 8], strides = [1, 1, 1]} : vector<2x8x96xf32> to vector<2x8x8xf32>
    %50 = vector.extract_strided_slice %41 {offsets = [0, 0, 56], sizes = [2, 8, 8], strides = [1, 1, 1]} : vector<2x8x96xf32> to vector<2x8x8xf32>
    %51 = tpu.concatenate %47, %48, %49, %50 in 1 : vector<2x8x8xf32>, vector<2x8x8xf32>, vector<2x8x8xf32>, vector<2x8x8xf32> -> vector<2x32x8xf32>
    %52 = vector.extract_strided_slice %41 {offsets = [0, 0, 64], sizes = [2, 8, 8], strides = [1, 1, 1]} : vector<2x8x96xf32> to vector<2x8x8xf32>
    %53 = vector.extract_strided_slice %41 {offsets = [0, 0, 72], sizes = [2, 8, 8], strides = [1, 1, 1]} : vector<2x8x96xf32> to vector<2x8x8xf32>
    %54 = vector.extract_strided_slice %41 {offsets = [0, 0, 80], sizes = [2, 8, 8], strides = [1, 1, 1]} : vector<2x8x96xf32> to vector<2x8x8xf32>
    %55 = vector.extract_strided_slice %41 {offsets = [0, 0, 88], sizes = [2, 8, 8], strides = [1, 1, 1]} : vector<2x8x96xf32> to vector<2x8x8xf32>
    %56 = tpu.concatenate %52, %53, %54, %55 in 1 : vector<2x8x8xf32>, vector<2x8x8xf32>, vector<2x8x8xf32>, vector<2x8x8xf32> -> vector<2x32x8xf32>
    "tpu.trace_start"() <{level = 10 : i32, message = "bmd,bnd->bmn"}> : () -> ()
    %cst_15 = arith.constant dense<0.000000e+00> : vector<2x32x32xf32>
    %57 = tpu.matmul %46, %51, %cst_15 {dimension_numbers = #tpu.dot_dimension_numbers<[2], [2], [1], [1], [0, 0, 0, 1, 1, 1], [0], [0]>} : vector<2x32x8xf32>, vector<2x32x8xf32>, vector<2x32x32xf32> -> vector<2x32x32xf32>
    "tpu.trace_stop"() : () -> ()
    %c0_16 = arith.constant 0 : index
    %c0_17 = arith.constant 0 : index
    %c0_18 = arith.constant 0 : index
    %58 = vector.load %arg14[%c0_16, %c0_17, %c0_18] : memref<1x32x32xf32, #tpu.memory_space<vmem>>, vector<1x32x32xf32>
    %59 = vector.broadcast %58 : vector<1x32x32xf32> to vector<2x32x32xf32>
    %60 = arith.addf %57, %59 : vector<2x32x32xf32>
    %cst_19 = arith.constant dense<0xFF800000> : vector<2x32xf32>
    %61 = vector.multi_reduction <maximumf>, %60, %cst_19 [2] : vector<2x32x32xf32> to vector<2x32xf32>
    %62 = vector.shape_cast %61 : vector<2x32xf32> to vector<2x32x1xf32>
    %63 = vector.broadcast %62 : vector<2x32x1xf32> to vector<2x32x32xf32>
    %64 = arith.subf %60, %63 : vector<2x32x32xf32>
    %65 = math.exp %64 : vector<2x32x32xf32>
    %cst_20 = arith.constant dense<0.000000e+00> : vector<2x32xf32>
    %66 = vector.multi_reduction <add>, %65, %cst_20 [2] : vector<2x32x32xf32> to vector<2x32xf32>
    %67 = vector.shape_cast %66 : vector<2x32xf32> to vector<2x32x1xf32>
    %68 = tpu.reciprocal %67 {approx = true} : vector<2x32x1xf32> -> vector<2x32x1xf32>
    %69 = arith.mulf %67, %68 : vector<2x32x1xf32>
    %cst_21 = arith.constant 2.000000e+00 : f32
    %70 = vector.broadcast %cst_21 : f32 to vector<2x32x1xf32>
    %71 = arith.subf %70, %69 : vector<2x32x1xf32>
    %72 = arith.mulf %68, %71 : vector<2x32x1xf32>
    %73 = vector.broadcast %72 : vector<2x32x1xf32> to vector<2x32x32xf32>
    %74 = arith.mulf %65, %73 : vector<2x32x32xf32>
    "tpu.trace_start"() <{level = 10 : i32, message = "bmn,bnd->bmd"}> : () -> ()
    %cst_22 = arith.constant dense<0.000000e+00> : vector<2x32x8xf32>
    %75 = tpu.matmul %74, %56, %cst_22 {dimension_numbers = #tpu.dot_dimension_numbers<[2], [1], [1], [2], [0, 0, 0, 1, 1, 2], [0], [0]>} : vector<2x32x32xf32>, vector<2x32x8xf32>, vector<2x32x8xf32> -> vector<2x32x8xf32>
    "tpu.trace_stop"() : () -> ()
    %76 = vector.extract_strided_slice %75 {offsets = [0, 0, 0], sizes = [2, 8, 8], strides = [1, 1, 1]} : vector<2x32x8xf32> to vector<2x8x8xf32>
    %77 = vector.extract_strided_slice %75 {offsets = [0, 8, 0], sizes = [2, 8, 8], strides = [1, 1, 1]} : vector<2x32x8xf32> to vector<2x8x8xf32>
    %78 = vector.extract_strided_slice %75 {offsets = [0, 16, 0], sizes = [2, 8, 8], strides = [1, 1, 1]} : vector<2x32x8xf32> to vector<2x8x8xf32>
    %79 = vector.extract_strided_slice %75 {offsets = [0, 24, 0], sizes = [2, 8, 8], strides = [1, 1, 1]} : vector<2x32x8xf32> to vector<2x8x8xf32>
    %80 = tpu.concatenate %76, %77, %78, %79 in 2 : vector<2x8x8xf32>, vector<2x8x8xf32>, vector<2x8x8xf32>, vector<2x8x8xf32> -> vector<2x8x32xf32>
    %81 = vector.shape_cast %80 : vector<2x8x32xf32> to vector<16x32xf32>
    %c0_23 = arith.constant 0 : index
    %c0_24 = arith.constant 0 : index
    %82 = vector.load %arg6[%c0_23, %c0_24] : memref<32x32xf32, #tpu.memory_space<vmem>>, vector<32x32xf32>
    %cst_25 = arith.constant dense<0.000000e+00> : vector<16x32xf32>
    %83 = tpu.matmul %81, %82, %cst_25 {dimension_numbers = #tpu.dot_dimension_numbers<[1], [0], [0], [1], [0, 0, 1, 1], [], []>} : vector<16x32xf32>, vector<32x32xf32>, vector<16x32xf32> -> vector<16x32xf32>
    %84 = arith.addf %0, %83 : vector<16x32xf32>
    %c0_26 = arith.constant 0 : index
    %c0_27 = arith.constant 0 : index
    %85 = vector.load %arg7[%c0_26, %c0_27] : memref<1x32xf32, #tpu.memory_space<vmem>>, vector<1x32xf32>
    %86 = vector.shape_cast %85 : vector<1x32xf32> to vector<32xf32>
    %87 = vector.shape_cast %86 : vector<32xf32> to vector<1x32xf32>
    %88 = vector.broadcast %87 : vector<1x32xf32> to vector<16x32xf32>
    %89 = arith.addf %84, %88 : vector<16x32xf32>
    %c0_28 = arith.constant 0 : index
    %c0_29 = arith.constant 0 : index
    %90 = vector.load %arg8[%c0_28, %c0_29] : memref<1x32xf32, #tpu.memory_space<vmem>>, vector<1x32xf32>
    %91 = vector.shape_cast %90 : vector<1x32xf32> to vector<32xf32>
    %c0_30 = arith.constant 0 : index
    %c0_31 = arith.constant 0 : index
    %92 = vector.load %arg9[%c0_30, %c0_31] : memref<1x32xf32, #tpu.memory_space<vmem>>, vector<1x32xf32>
    %93 = vector.shape_cast %92 : vector<1x32xf32> to vector<32xf32>
    %cst_32 = arith.constant dense<0.000000e+00> : vector<16xf32>
    %94 = vector.multi_reduction <add>, %89, %cst_32 [1] : vector<16x32xf32> to vector<16xf32>
    %95 = vector.shape_cast %94 : vector<16xf32> to vector<16x1xf32>
    %cst_33 = arith.constant 3.200000e+01 : f32
    %96 = vector.broadcast %cst_33 : f32 to vector<16x1xf32>
    %97 = arith.divf %95, %96 : vector<16x1xf32>
    %98 = vector.broadcast %97 : vector<16x1xf32> to vector<16x32xf32>
    %99 = arith.subf %89, %98 : vector<16x32xf32>
    %100 = arith.mulf %99, %99 : vector<16x32xf32>
    %cst_34 = arith.constant dense<0.000000e+00> : vector<16xf32>
    %101 = vector.multi_reduction <add>, %100, %cst_34 [1] : vector<16x32xf32> to vector<16xf32>
    %102 = vector.shape_cast %101 : vector<16xf32> to vector<16x1xf32>
    %cst_35 = arith.constant 3.100000e+01 : f32
    %103 = vector.broadcast %cst_35 : f32 to vector<16x1xf32>
    %104 = arith.divf %102, %103 : vector<16x1xf32>
    %105 = math.sqrt %104 : vector<16x1xf32>
    %cst_36 = arith.constant 9.99999997E-7 : f32
    %106 = vector.broadcast %cst_36 : f32 to vector<16x1xf32>
    %107 = arith.addf %105, %106 : vector<16x1xf32>
    %108 = tpu.reciprocal %107 {approx = true} : vector<16x1xf32> -> vector<16x1xf32>
    %109 = arith.mulf %107, %108 : vector<16x1xf32>
    %cst_37 = arith.constant 2.000000e+00 : f32
    %110 = vector.broadcast %cst_37 : f32 to vector<16x1xf32>
    %111 = arith.subf %110, %109 : vector<16x1xf32>
    %112 = arith.mulf %108, %111 : vector<16x1xf32>
    %113 = vector.broadcast %97 : vector<16x1xf32> to vector<16x32xf32>
    %114 = arith.subf %89, %113 : vector<16x32xf32>
    %115 = vector.shape_cast %91 : vector<32xf32> to vector<1x32xf32>
    %116 = vector.broadcast %115 : vector<1x32xf32> to vector<16x32xf32>
    %117 = arith.mulf %116, %114 : vector<16x32xf32>
    %118 = vector.broadcast %112 : vector<16x1xf32> to vector<16x32xf32>
    %119 = arith.mulf %117, %118 : vector<16x32xf32>
    %120 = vector.shape_cast %93 : vector<32xf32> to vector<1x32xf32>
    %121 = vector.broadcast %120 : vector<1x32xf32> to vector<16x32xf32>
    %122 = arith.addf %119, %121 : vector<16x32xf32>
    %c0_38 = arith.constant 0 : index
    %c0_39 = arith.constant 0 : index
    %123 = vector.load %arg10[%c0_38, %c0_39] : memref<32x128xf32, #tpu.memory_space<vmem>>, vector<32x128xf32>
    %cst_40 = arith.constant dense<0.000000e+00> : vector<16x128xf32>
    %124 = tpu.matmul %122, %123, %cst_40 {dimension_numbers = #tpu.dot_dimension_numbers<[1], [0], [0], [1], [0, 0, 1, 1], [], []>} : vector<16x32xf32>, vector<32x128xf32>, vector<16x128xf32> -> vector<16x128xf32>
    %c0_41 = arith.constant 0 : index
    %c0_42 = arith.constant 0 : index
    %125 = vector.load %arg11[%c0_41, %c0_42] : memref<1x128xf32, #tpu.memory_space<vmem>>, vector<1x128xf32>
    %126 = vector.shape_cast %125 : vector<1x128xf32> to vector<128xf32>
    %127 = vector.shape_cast %126 : vector<128xf32> to vector<1x128xf32>
    %128 = vector.broadcast %127 : vector<1x128xf32> to vector<16x128xf32>
    %129 = arith.addf %124, %128 : vector<16x128xf32>
    %cst_43 = arith.constant 0.000000e+00 : f32
    %130 = vector.broadcast %cst_43 : f32 to vector<16x128xf32>
    %131 = arith.maximumf %129, %130 : vector<16x128xf32>
    %c0_44 = arith.constant 0 : index
    %c0_45 = arith.constant 0 : index
    %132 = vector.load %arg12[%c0_44, %c0_45] : memref<128x32xf32, #tpu.memory_space<vmem>>, vector<128x32xf32>
    %cst_46 = arith.constant dense<0.000000e+00> : vector<16x32xf32>
    %133 = tpu.matmul %131, %132, %cst_46 {dimension_numbers = #tpu.dot_dimension_numbers<[1], [0], [0], [1], [0, 0, 1, 1], [], []>} : vector<16x128xf32>, vector<128x32xf32>, vector<16x32xf32> -> vector<16x32xf32>
    %c0_47 = arith.constant 0 : index
    %c0_48 = arith.constant 0 : index
    %134 = vector.load %arg13[%c0_47, %c0_48] : memref<1x32xf32, #tpu.memory_space<vmem>>, vector<1x32xf32>
    %135 = vector.shape_cast %134 : vector<1x32xf32> to vector<32xf32>
    %136 = vector.shape_cast %135 : vector<32xf32> to vector<1x32xf32>
    %137 = vector.broadcast %136 : vector<1x32xf32> to vector<16x32xf32>
    %138 = arith.addf %133, %137 : vector<16x32xf32>
    %139 = arith.addf %89, %138 : vector<16x32xf32>
    %c0_49 = arith.constant 0 : index
    %c0_50 = arith.constant 0 : index
    %140 = vector.load %arg15[%c0_49, %c0_50] : memref<16x32xf32, #tpu.memory_space<vmem>>, vector<16x32xf32>
    tpu.vector_store %arg15[%c0_49, %c0_50], %139 {strides = array<i32>} : memref<16x32xf32, #tpu.memory_space<vmem>>, vector<16x32xf32>,
    return
  }
  func.func @transform_0(%arg0: i32) -> (i32, i32) {
    %c0_i32 = arith.constant 0 : i32
    %c0_i32_0 = arith.constant 0 : i32
    return %arg0, %c0_i32 : i32, i32
  }
  func.func @transform_1(%arg0: i32) -> (i32, i32) {
    %c0_i32 = arith.constant 0 : i32
    %c0_i32_0 = arith.constant 0 : i32
    %c0_i32_1 = arith.constant 0 : i32
    return %c0_i32, %c0_i32_0 : i32, i32
  }
  func.func @transform_2(%arg0: i32) -> (i32, i32) {
    %c0_i32 = arith.constant 0 : i32
    %c0_i32_0 = arith.constant 0 : i32
    %c0_i32_1 = arith.constant 0 : i32
    return %c0_i32, %c0_i32_0 : i32, i32
  }
  func.func @transform_3(%arg0: i32) -> (i32, i32) {
    %c0_i32 = arith.constant 0 : i32
    %c0_i32_0 = arith.constant 0 : i32
    %c0_i32_1 = arith.constant 0 : i32
    return %c0_i32, %c0_i32_0 : i32, i32
  }
  func.func @transform_4(%arg0: i32) -> (i32, i32) {
    %c0_i32 = arith.constant 0 : i32
    %c0_i32_0 = arith.constant 0 : i32
    %c0_i32_1 = arith.constant 0 : i32
    return %c0_i32, %c0_i32_0 : i32, i32
  }
  func.func @transform_5(%arg0: i32) -> (i32, i32) {
    %c0_i32 = arith.constant 0 : i32
    %c0_i32_0 = arith.constant 0 : i32
    %c0_i32_1 = arith.constant 0 : i32
    return %c0_i32, %c0_i32_0 : i32, i32
  }
  func.func @transform_6(%arg0: i32) -> (i32, i32) {
    %c0_i32 = arith.constant 0 : i32
    %c0_i32_0 = arith.constant 0 : i32
    %c0_i32_1 = arith.constant 0 : i32
    return %c0_i32, %c0_i32_0 : i32, i32
  }
  func.func @transform_7(%arg0: i32) -> (i32, i32) {
    %c0_i32 = arith.constant 0 : i32
    %c0_i32_0 = arith.constant 0 : i32
    %c0_i32_1 = arith.constant 0 : i32
    return %c0_i32, %c0_i32_0 : i32, i32
  }
  func.func @transform_8(%arg0: i32) -> (i32, i32) {
    %c0_i32 = arith.constant 0 : i32
    %c0_i32_0 = arith.constant 0 : i32
    %c0_i32_1 = arith.constant 0 : i32
    return %c0_i32, %c0_i32_0 : i32, i32
  }
  func.func @transform_9(%arg0: i32) -> (i32, i32) {
    %c0_i32 = arith.constant 0 : i32
    %c0_i32_0 = arith.constant 0 : i32
    %c0_i32_1 = arith.constant 0 : i32
    return %c0_i32, %c0_i32_0 : i32, i32
  }
  func.func @transform_10(%arg0: i32) -> (i32, i32) {
    %c0_i32 = arith.constant 0 : i32
    %c0_i32_0 = arith.constant 0 : i32
    %c0_i32_1 = arith.constant 0 : i32
    return %c0_i32, %c0_i32_0 : i32, i32
  }
  func.func @transform_11(%arg0: i32) -> (i32, i32) {
    %c0_i32 = arith.constant 0 : i32
    %c0_i32_0 = arith.constant 0 : i32
    %c0_i32_1 = arith.constant 0 : i32
    return %c0_i32, %c0_i32_0 : i32, i32
  }
  func.func @transform_12(%arg0: i32) -> (i32, i32) {
    %c0_i32 = arith.constant 0 : i32
    %c0_i32_0 = arith.constant 0 : i32
    %c0_i32_1 = arith.constant 0 : i32
    return %c0_i32, %c0_i32_0 : i32, i32
  }
  func.func @transform_13(%arg0: i32) -> (i32, i32, i32) {
    %c0_i32 = arith.constant 0 : i32
    %c0_i32_0 = arith.constant 0 : i32
    %c0_i32_1 = arith.constant 0 : i32
    %c0_i32_2 = arith.constant 0 : i32
    return %c0_i32, %c0_i32_0, %c0_i32_1 : i32, i32, i32
  }
  func.func @transform_14(%arg0: i32) -> (i32, i32) {
    %c0_i32 = arith.constant 0 : i32
    %c0_i32_0 = arith.constant 0 : i32
    return %arg0, %c0_i32 : i32, i32
  }
}

</mosaic_0001>

<llo_original>
// kernel: tpu_custom_call.1
$region0: #{tpu_custom_call.1}
  #allocation0 [shape = 'u32[]', space=smem, size = 0x4, offset = 0x4, fixed_abs, tag = 'smem constant byte address 0x4 - core index']
  #allocation1 [shape = 'u32[144,128]{1,0:T(1,128)}', space=vmem, size = 0x12000, scoped, tag = 'internal scratch']
  %s0 = inlined_call_operand.vmem [shape: f32[16,32], index: 0, kind: input, shape index: {}]
  %s1 = inlined_call_operand.vmem [shape: f32[1,32], index: 1, kind: input, shape index: {}]
  %s2 = inlined_call_operand.vmem [shape: f32[1,32], index: 2, kind: input, shape index: {}]
  %s3 = inlined_call_operand.vmem [shape: f32[32,96], index: 3, kind: input, shape index: {}]
  %s4 = inlined_call_operand.vmem [shape: f32[1,96], index: 4, kind: input, shape index: {}]
  %s5 = inlined_call_operand.vmem [shape: f32[32,32], index: 5, kind: input, shape index: {}]
  %s6 = inlined_call_operand.vmem [shape: f32[1,32], index: 6, kind: input, shape index: {}]
  %s7 = inlined_call_operand.vmem [shape: f32[1,32], index: 7, kind: input, shape index: {}]
  %s8 = inlined_call_operand.vmem [shape: f32[1,32], index: 8, kind: input, shape index: {}]
  %s9 = inlined_call_operand.vmem [shape: f32[32,128], index: 9, kind: input, shape index: {}]
  %s10 = inlined_call_operand.vmem [shape: f32[1,128], index: 10, kind: input, shape index: {}]
  %s11 = inlined_call_operand.vmem [shape: f32[128,32], index: 11, kind: input, shape index: {}]
  %s12 = inlined_call_operand.vmem [shape: f32[1,32], index: 12, kind: input, shape index: {}]
  %s13 = inlined_call_operand.vmem [shape: f32[1,32,32], index: 13, kind: input, shape index: {}]
  %s14 = inlined_call_operand.hbm [shape: f32[16,32], index: 14, kind: output, shape index: {}]
  %s15 = sld [smem:[#allocation0]]
  $region66: #{tpu_custom_call.1} parent=0
    _
  %s17 = ssub.s32 1, %s15
  %s18 = scalar_select 0, %s17, %s15
  $region1: #{tpu_custom_call.1} parent=0
    #allocation2 [shape = 'u8[8192]{0}', space=vmem, size = 0x2000, scoped, tag = 'output window, operand 0, single buffered']
    #allocation3 [shape = 's32[1]{0}', space=sflag, size = 0x4, scoped, tag = 'scoped memory for tpu_custom_call.1']
    %19 = vsyncpa [#allocation3], 0
    // Predicated region
    $region2: #{tpu_custom_call.1} parent=1 // pred_check
      _
    $region3: #{tpu_custom_call.1} parent=1 // pred_check_branch
      %21 = sbr.rel (0) target = $region5
    $region4: #{tpu_custom_call.1} parent=1 // pred_region
      _
    $region5: #{tpu_custom_call.1} parent=1 // pred_fallthru
      _
    // Predicated region
    $region6: #{tpu_custom_call.1} parent=1 // pred_check
      _
    $region7: #{tpu_custom_call.1} parent=1 // pred_check_branch
      %23 = sbr.rel (0) target = $region9
    $region8: #{tpu_custom_call.1} parent=1 // pred_region
      _
    $region9: #{tpu_custom_call.1} parent=1 // pred_fallthru
      _
    // Predicated region
    $region10: #{tpu_custom_call.1} parent=1 // pred_check
      _
    $region11: #{tpu_custom_call.1} parent=1 // pred_check_branch
      %25 = sbr.rel (0) target = $region13
    $region12: #{tpu_custom_call.1} parent=1 // pred_region
      _
    $region13: #{tpu_custom_call.1} parent=1 // pred_fallthru
      _
    // Predicated region
    $region14: #{tpu_custom_call.1} parent=1 // pred_check
      _
    $region15: #{tpu_custom_call.1} parent=1 // pred_check_branch
      %27 = sbr.rel (0) target = $region17
    $region16: #{tpu_custom_call.1} parent=1 // pred_region
      _
    $region17: #{tpu_custom_call.1} parent=1 // pred_fallthru
      _
    // Predicated region
    $region18: #{tpu_custom_call.1} parent=1 // pred_check
      _
    $region19: #{tpu_custom_call.1} parent=1 // pred_check_branch
      %29 = sbr.rel (0) target = $region21
    $region20: #{tpu_custom_call.1} parent=1 // pred_region
      _
    $region21: #{tpu_custom_call.1} parent=1 // pred_fallthru
      _
    // Predicated region
    $region22: #{tpu_custom_call.1} parent=1 // pred_check
      _
    $region23: #{tpu_custom_call.1} parent=1 // pred_check_branch
      %31 = sbr.rel (0) target = $region25
    $region24: #{tpu_custom_call.1} parent=1 // pred_region
      _
    $region25: #{tpu_custom_call.1} parent=1 // pred_fallthru
      _
    // Predicated region
    $region26: #{tpu_custom_call.1} parent=1 // pred_check
      _
    $region27: #{tpu_custom_call.1} parent=1 // pred_check_branch
      %33 = sbr.rel (0) target = $region29
    $region28: #{tpu_custom_call.1} parent=1 // pred_region
      _
    $region29: #{tpu_custom_call.1} parent=1 // pred_fallthru
      _
    // Predicated region
    $region30: #{tpu_custom_call.1} parent=1 // pred_check
      _
    $region31: #{tpu_custom_call.1} parent=1 // pred_check_branch
      %35 = sbr.rel (0) target = $region33
    $region32: #{tpu_custom_call.1} parent=1 // pred_region
      _
    $region33: #{tpu_custom_call.1} parent=1 // pred_fallthru
      _
    // Predicated region
    $region34: #{tpu_custom_call.1} parent=1 // pred_check
      _
    $region35: #{tpu_custom_call.1} parent=1 // pred_check_branch
      %37 = sbr.rel (0) target = $region37
    $region36: #{tpu_custom_call.1} parent=1 // pred_region
      _
    $region37: #{tpu_custom_call.1} parent=1 // pred_fallthru
      _
    // Predicated region
    $region38: #{tpu_custom_call.1} parent=1 // pred_check
      _
    $region39: #{tpu_custom_call.1} parent=1 // pred_check_branch
      %39 = sbr.rel (0) target = $region41
    $region40: #{tpu_custom_call.1} parent=1 // pred_region
      _
    $region41: #{tpu_custom_call.1} parent=1 // pred_fallthru
      _
    // Predicated region
    $region42: #{tpu_custom_call.1} parent=1 // pred_check
      _
    $region43: #{tpu_custom_call.1} parent=1 // pred_check_branch
      %41 = sbr.rel (0) target = $region45
    $region44: #{tpu_custom_call.1} parent=1 // pred_region
      _
    $region45: #{tpu_custom_call.1} parent=1 // pred_fallthru
      _
    // Predicated region
    $region46: #{tpu_custom_call.1} parent=1 // pred_check
      _
    $region47: #{tpu_custom_call.1} parent=1 // pred_check_branch
      %43 = sbr.rel (0) target = $region49
    $region48: #{tpu_custom_call.1} parent=1 // pred_region
      _
    $region49: #{tpu_custom_call.1} parent=1 // pred_fallthru
      _
    // Predicated region
    $region50: #{tpu_custom_call.1} parent=1 // pred_check
      _
    $region51: #{tpu_custom_call.1} parent=1 // pred_check_branch
      %45 = sbr.rel (0) target = $region53
    $region52: #{tpu_custom_call.1} parent=1 // pred_region
      _
    $region53: #{tpu_custom_call.1} parent=1 // pred_fallthru
      _
    // Predicated region
    $region54: #{tpu_custom_call.1} parent=1 // pred_check
      _
    $region55: #{tpu_custom_call.1} parent=1 // pred_check_branch
      %47 = sbr.rel (0) target = $region57
    $region56: #{tpu_custom_call.1} parent=1 // pred_region
      _
    $region57: #{tpu_custom_call.1} parent=1 // pred_fallthru
      _
    %v48 = vld [vmem:[%s0] sm:$0xff]
    %v49 = vld [vmem:[%s0 + $0x8] sm:$0xff]
    %v50 = vld [vmem:[%s1] sm:$0x1]
    %v51 = vld [vmem:[%s2] sm:$0x1]
    %vm52 = vcmask 261120
    %v53 = vsel %vm52, %v48, 0.0
    %54 = vadd.xlane.f32.xlu0 %v53
    %v55 = vpop.xlane.xlu0 %54
    %v56 = vsel %vm52, %v49, 0.0
    %57 = vadd.xlane.f32.xlu0 %v56
    %v58 = vpop.xlane.xlu0 %57
    %v59 = vrcp.pop 32.0
    %v60 = vmul.f32 %v55, %v59
    %v61 = vmul.f32 %v58, %v59
    %v62 = vsub.f32 %v48, %v60
    %v63 = vsub.f32 %v49, %v61
    %v64 = vmul.f32 %v62, %v62
    %v65 = vmul.f32 %v63, %v63
    %v66 = vsel %vm52, %v64, 0.0
    %67 = vadd.xlane.f32.xlu0 %v66
    %v68 = vpop.xlane.xlu0 %67
    %v69 = vsel %vm52, %v65, 0.0
    %70 = vadd.xlane.f32.xlu0 %v69
    %v71 = vpop.xlane.xlu0 %70
    %v72 = vrcp.pop 31.0
    %v73 = vmul.f32 %v68, %v72
    %v74 = vmul.f32 %v71, %v72
    %v75 = vrsqrt.pop %v73
    %v76 = vmul.f32 %v73, %v75
    %vm77 = vcmp.eq.f32.partialorder %v73, inf
    %v78 = vsel %vm77, %v73, %v76
    %vm79 = vcmp.eq.f32.partialorder %v73, 0.0
    %v80 = vand.u32 %v73, 2147483648
    %v81 = vsel %vm79, %v80, %v78
    %v82 = vrsqrt.pop %v74
    %v83 = vmul.f32 %v74, %v82
    %vm84 = vcmp.eq.f32.partialorder %v74, inf
    %v85 = vsel %vm84, %v74, %v83
    %vm86 = vcmp.eq.f32.partialorder %v74, 0.0
    %v87 = vand.u32 %v74, 2147483648
    %v88 = vsel %vm86, %v87, %v85
    %v89 = vadd.f32 %v81, 1e-06
    %v90 = vadd.f32 %v88, 1e-06
    %v91 = vrcp.pop %v89
    %v92 = vrcp.pop %v90
    %v93 = vmul.f32 %v89, %v91
    %v94 = vmul.f32 %v90, %v92
    %v95 = vsub.f32 2.0, %v93
    %v96 = vsub.f32 2.0, %v94
    %v97 = vmul.f32 %v91, %v95
    %v98 = vmul.f32 %v92, %v96
    %v100 = vlaneseq
    %v101 = vshrl.u32 %v100, 7
    %v102 = vsub.s32 0, %v101
    %v103 = vrot.slane %v50, %v102
    %v105 = vmul.f32 %v103, %v62
    %v106 = vmul.f32 %v103, %v63
    %v107 = vmul.f32 %v105, %v97
    %v108 = vmul.f32 %v106, %v98
    %v110 = vlaneseq
    %v111 = vshrl.u32 %v110, 7
    %v112 = vsub.s32 0, %v111
    %v113 = vrot.slane %v51, %v112
    %v115 = vadd.f32 %v107, %v113
    %v116 = vadd.f32 %v108, %v113
    %v117 = vld [vmem:[%s3] sm:$0xff]
    %v118 = vld [vmem:[%s3 + $0x8] sm:$0xff]
    %v119 = vld [vmem:[%s3 + $0x10] sm:$0xff]
    %v120 = vld [vmem:[%s3 + $0x18] sm:$0xff]
    %v121 = vld [vmem:[%s4] sm:$0x1]
    %v123 = vlaneseq
    %v124 = vshrl.u32 %v123, 7
    %v125 = vsub.s32 0, %v124
    %v126 = vrot.slane %v121, %v125
    %v129 = vsel %vm52, %v115, 0
    %v132 = vsel %vm52, %v116, 0
    %134 = vmatprep.subr.mxu0 0.0
    %135 = vmatpush1.msra.mxu0 0.0
    %136 = vmatprep.subr.mxu0 0.0
    %137 = vmatpush1.msra.mxu0 0.0
    %138 = vmatprep.subr.mxu0 0.0
    %139 = vmatpush1.msra.mxu0 0.0
    %140 = vmatprep.subr.mxu0 0.0
    %141 = vmatpush1.msra.mxu0 0.0
    %142 = vmatprep.subr.mxu0 0.0
    %143 = vmatpush1.msra.mxu0 0.0
    %144 = vmatprep.subr.mxu0 0.0
    %145 = vmatpush1.msra.mxu0 0.0
    %146 = vmatprep.subr.mxu0 0.0
    %147 = vmatpush1.msra.mxu0 0.0
    %148 = vmatprep.subr.mxu0 0.0
    %149 = vmatpush1.msra.mxu0 0.0
    %150 = vmatprep.subr.mxu0 0.0
    %151 = vmatpush1.msra.mxu0 0.0
    %152 = vmatprep.subr.mxu0 0.0
    %153 = vmatpush1.msra.mxu0 0.0
    %154 = vmatprep.subr.mxu0 0.0
    %155 = vmatpush1.msra.mxu0 0.0
    %156 = vmatprep.subr.mxu0 0.0
    %157 = vmatpush1.msra.mxu0 0.0
    %158 = vmatprep.subr.mxu0 0.0
    %159 = vmatpush1.msra.mxu0 %v120
    %160 = vmatprep.subr.mxu0 0.0
    %161 = vmatpush1.msra.mxu0 %v119
    %162 = vmatprep.subr.mxu0 0.0
    %163 = vmatpush1.msra.mxu0 %v118
    %164 = vmatprep.subr.mxu0 0.0
    %165 = vmatpush1.msra.mxu0 %v117
    %166 = vmatprep.subr.mxu0 0.0
    %167 = vmatpush2.msra.mxu0 0.0
    %168 = vmatprep.subr.mxu0 0.0
    %169 = vmatpush2.msra.mxu0 0.0
    %170 = vmatprep.subr.mxu0 0.0
    %171 = vmatpush2.msra.mxu0 0.0
    %172 = vmatprep.subr.mxu0 0.0
    %173 = vmatpush2.msra.mxu0 0.0
    %174 = vmatprep.subr.mxu0 0.0
    %175 = vmatpush2.msra.mxu0 0.0
    %176 = vmatprep.subr.mxu0 0.0
    %177 = vmatpush2.msra.mxu0 0.0
    %178 = vmatprep.subr.mxu0 0.0
    %179 = vmatpush2.msra.mxu0 0.0
    %180 = vmatprep.subr.mxu0 0.0
    %181 = vmatpush2.msra.mxu0 0.0
    %182 = vmatprep.subr.mxu0 0.0
    %183 = vmatpush2.msra.mxu0 0.0
    %184 = vmatprep.subr.mxu0 0.0
    %185 = vmatpush2.msra.mxu0 0.0
    %186 = vmatprep.subr.mxu0 0.0
    %187 = vmatpush2.msra.mxu0 0.0
    %188 = vmatprep.subr.mxu0 0.0
    %189 = vmatpush2.msra.mxu0 0.0
    %190 = vmatprep.subr.mxu0 0.0
    %191 = vmatpush2.msra.mxu0 0.0
    %192 = vmatprep.subr.mxu0 0.0
    %193 = vmatpush2.msra.mxu0 0.0
    %194 = vmatprep.subr.mxu0 0.0
    %195 = vmatpush2.msra.mxu0 0.0
    %196 = vmatprep.subr.mxu0 0.0
    %197 = vmatpush2.msra.mxu0 0.0
    %198 = vmatprep.mubr.f32.mxu0 0.0
    %199 = vmatmul.mubr.f32.gmra.mxu0 %v129
    %v200 = vpop.f32.mrf.mxu0
    %v201 = vadd.f32 %v126, %v200
    %v202 = vpop.f32.mrf.mxu0
    %203 = vmatprep.mubr.f32.mxu0 0.0
    %204 = vmatmul.mubr.f32.gmra.mxu0 %v132
    %v205 = vpop.f32.mrf.mxu0
    %v206 = vadd.f32 %v126, %v205
    %v207 = vpop.f32.mrf.mxu0
    %208 = vdwg.mxu0
    %211 = vrot.lane.b32.xlu0 %v201, 120
    %v212 = vpop.permute.xlu0 %211
    %213 = vrot.lane.b32.xlu0 %v206, 120
    %v214 = vpop.permute.xlu0 %213
    %215 = vrot.lane.b32.xlu0 %v201, 112
    %v216 = vpop.permute.xlu0 %215
    %217 = vrot.lane.b32.xlu0 %v206, 112
    %v218 = vpop.permute.xlu0 %217
    %219 = vrot.lane.b32.xlu0 %v201, 104
    %v220 = vpop.permute.xlu0 %219
    %221 = vrot.lane.b32.xlu0 %v206, 104
    %v222 = vpop.permute.xlu0 %221
    %v223 = vld [vmem:[%s13] sm:$0xff]
    %v224 = vld [vmem:[%s13 + $0x8] sm:$0xff]
    %v225 = vld [vmem:[%s13 + $0x10] sm:$0xff]
    %v226 = vld [vmem:[%s13 + $0x18] sm:$0xff]
    %227 = vrot.lane.b32.xlu0 %v201, 96
    %v228 = vpop.permute.xlu0 %227
    %229 = vrot.lane.b32.xlu0 %v212, 96
    %v230 = vpop.permute.xlu0 %229
    %231 = vrot.lane.b32.xlu0 %v216, 96
    %v232 = vpop.permute.xlu0 %231
    %233 = vrot.lane.b32.xlu0 %v220, 96
    %v234 = vpop.permute.xlu0 %233
    %vm235 = vcmask 64512
    %v236 = vsel %vm235, %v201, 0
    %v238 = vsel %vm235, %v212, 0
    %v240 = vsel %vm235, %v216, 0
    %v242 = vsel %vm235, %v220, 0
    %v244 = vsel %vm235, %v228, 0
    %v246 = vsel %vm235, %v230, 0
    %v248 = vsel %vm235, %v232, 0
    %v250 = vsel %vm235, %v234, 0
    %252 = vmatprep.subr.mxu0 0.0
    %253 = vmatpush1.xpose.msra.mxu0 0.0
    %254 = vmatprep.subr.mxu0 0.0
    %255 = vmatpush1.xpose.msra.mxu0 0.0
    %256 = vmatprep.subr.mxu0 0.0
    %257 = vmatpush1.xpose.msra.mxu0 0.0
    %258 = vmatprep.subr.mxu0 0.0
    %259 = vmatpush1.xpose.msra.mxu0 0.0
    %260 = vmatprep.subr.mxu0 0.0
    %261 = vmatpush1.xpose.msra.mxu0 0.0
    %262 = vmatprep.subr.mxu0 0.0
    %263 = vmatpush1.xpose.msra.mxu0 0.0
    %264 = vmatprep.subr.mxu0 0.0
    %265 = vmatpush1.xpose.msra.mxu0 0.0
    %266 = vmatprep.subr.mxu0 0.0
    %267 = vmatpush1.xpose.msra.mxu0 0.0
    %268 = vmatprep.subr.mxu0 0.0
    %269 = vmatpush1.xpose.msra.mxu0 0.0
    %270 = vmatprep.subr.mxu0 0.0
    %271 = vmatpush1.xpose.msra.mxu0 0.0
    %272 = vmatprep.subr.mxu0 0.0
    %273 = vmatpush1.xpose.msra.mxu0 0.0
    %274 = vmatprep.subr.mxu0 0.0
    %275 = vmatpush1.xpose.msra.mxu0 0.0
    %276 = vmatprep.subr.mxu0 0.0
    %277 = vmatpush1.xpose.msra.mxu0 %v250
    %278 = vmatprep.subr.mxu0 0.0
    %279 = vmatpush1.xpose.msra.mxu0 %v248
    %280 = vmatprep.subr.mxu0 0.0
    %281 = vmatpush1.xpose.msra.mxu0 %v246
    %282 = vmatprep.subr.mxu0 0.0
    %283 = vmatpush1.xpose.msra.mxu0 %v244
    %284 = vmatprep.subr.mxu0 0.0
    %285 = vmatpush2.xpose.msra.mxu0 0.0
    %286 = vmatprep.subr.mxu0 0.0
    %287 = vmatpush2.xpose.msra.mxu0 0.0
    %288 = vmatprep.subr.mxu0 0.0
    %289 = vmatpush2.xpose.msra.mxu0 0.0
    %290 = vmatprep.subr.mxu0 0.0
    %291 = vmatpush2.xpose.msra.mxu0 0.0
    %292 = vmatprep.subr.mxu0 0.0
    %293 = vmatpush2.xpose.msra.mxu0 0.0
    %294 = vmatprep.subr.mxu0 0.0
    %295 = vmatpush2.xpose.msra.mxu0 0.0
    %296 = vmatprep.subr.mxu0 0.0
    %297 = vmatpush2.xpose.msra.mxu0 0.0
    %298 = vmatprep.subr.mxu0 0.0
    %299 = vmatpush2.xpose.msra.mxu0 0.0
    %300 = vmatprep.subr.mxu0 0.0
    %301 = vmatpush2.xpose.msra.mxu0 0.0
    %302 = vmatprep.subr.mxu0 0.0
    %303 = vmatpush2.xpose.msra.mxu0 0.0
    %304 = vmatprep.subr.mxu0 0.0
    %305 = vmatpush2.xpose.msra.mxu0 0.0
    %306 = vmatprep.subr.mxu0 0.0
    %307 = vmatpush2.xpose.msra.mxu0 0.0
    %308 = vmatprep.subr.mxu0 0.0
    %309 = vmatpush2.xpose.msra.mxu0 0.0
    %310 = vmatprep.subr.mxu0 0.0
    %311 = vmatpush2.xpose.msra.mxu0 0.0
    %312 = vmatprep.subr.mxu0 0.0
    %313 = vmatpush2.xpose.msra.mxu0 0.0
    %314 = vmatprep.subr.mxu0 0.0
    %315 = vmatpush2.xpose.msra.mxu0 0.0
    %316 = vmatprep.mubr.f32.mxu0 0.0
    %317 = vmatmul.mubr.f32.gmra.mxu0 %v236
    %v318 = vpop.f32.mrf.mxu0
    %v319 = vadd.f32 %v223, %v318
    %v320 = vpop.f32.mrf.mxu0
    %321 = vmatprep.mubr.f32.mxu0 0.0
    %322 = vmatmul.mubr.f32.gmra.mxu0 %v238
    %v323 = vpop.f32.mrf.mxu0
    %v324 = vadd.f32 %v224, %v323
    %v325 = vpop.f32.mrf.mxu0
    %326 = vmatprep.mubr.f32.mxu0 0.0
    %327 = vmatmul.mubr.f32.gmra.mxu0 %v240
    %v328 = vpop.f32.mrf.mxu0
    %v329 = vadd.f32 %v225, %v328
    %v330 = vpop.f32.mrf.mxu0
    %331 = vmatprep.mubr.f32.mxu0 0.0
    %332 = vmatmul.mubr.f32.gmra.mxu0 %v242
    %v333 = vpop.f32.mrf.mxu0
    %v334 = vadd.f32 %v226, %v333
    %v335 = vpop.f32.mrf.mxu0
    %336 = vdwg.mxu0
    %337 = vrot.lane.b32.xlu0 %v206, 96
    %v338 = vpop.permute.xlu0 %337
    %339 = vrot.lane.b32.xlu0 %v214, 96
    %v340 = vpop.permute.xlu0 %339
    %341 = vrot.lane.b32.xlu0 %v218, 96
    %v342 = vpop.permute.xlu0 %341
    %343 = vrot.lane.b32.xlu0 %v222, 96
    %v344 = vpop.permute.xlu0 %343
    %v345 = vsel %vm235, %v206, 0
    %v347 = vsel %vm235, %v214, 0
    %v349 = vsel %vm235, %v218, 0
    %v351 = vsel %vm235, %v222, 0
    %v353 = vsel %vm235, %v338, 0
    %v355 = vsel %vm235, %v340, 0
    %v357 = vsel %vm235, %v342, 0
    %v359 = vsel %vm235, %v344, 0
    %361 = vmatprep.subr.mxu0 0.0
    %362 = vmatpush1.xpose.msra.mxu0 0.0
    %363 = vmatprep.subr.mxu0 0.0
    %364 = vmatpush1.xpose.msra.mxu0 0.0
    %365 = vmatprep.subr.mxu0 0.0
    %366 = vmatpush1.xpose.msra.mxu0 0.0
    %367 = vmatprep.subr.mxu0 0.0
    %368 = vmatpush1.xpose.msra.mxu0 0.0
    %369 = vmatprep.subr.mxu0 0.0
    %370 = vmatpush1.xpose.msra.mxu0 0.0
    %371 = vmatprep.subr.mxu0 0.0
    %372 = vmatpush1.xpose.msra.mxu0 0.0
    %373 = vmatprep.subr.mxu0 0.0
    %374 = vmatpush1.xpose.msra.mxu0 0.0
    %375 = vmatprep.subr.mxu0 0.0
    %376 = vmatpush1.xpose.msra.mxu0 0.0
    %377 = vmatprep.subr.mxu0 0.0
    %378 = vmatpush1.xpose.msra.mxu0 0.0
    %379 = vmatprep.subr.mxu0 0.0
    %380 = vmatpush1.xpose.msra.mxu0 0.0
    %381 = vmatprep.subr.mxu0 0.0
    %382 = vmatpush1.xpose.msra.mxu0 0.0
    %383 = vmatprep.subr.mxu0 0.0
    %384 = vmatpush1.xpose.msra.mxu0 0.0
    %385 = vmatprep.subr.mxu0 0.0
    %386 = vmatpush1.xpose.msra.mxu0 %v359
    %387 = vmatprep.subr.mxu0 0.0
    %388 = vmatpush1.xpose.msra.mxu0 %v357
    %389 = vmatprep.subr.mxu0 0.0
    %390 = vmatpush1.xpose.msra.mxu0 %v355
    %391 = vmatprep.subr.mxu0 0.0
    %392 = vmatpush1.xpose.msra.mxu0 %v353
    %393 = vmatprep.subr.mxu0 0.0
    %394 = vmatpush2.xpose.msra.mxu0 0.0
    %395 = vmatprep.subr.mxu0 0.0
    %396 = vmatpush2.xpose.msra.mxu0 0.0
    %397 = vmatprep.subr.mxu0 0.0
    %398 = vmatpush2.xpose.msra.mxu0 0.0
    %399 = vmatprep.subr.mxu0 0.0
    %400 = vmatpush2.xpose.msra.mxu0 0.0
    %401 = vmatprep.subr.mxu0 0.0
    %402 = vmatpush2.xpose.msra.mxu0 0.0
    %403 = vmatprep.subr.mxu0 0.0
    %404 = vmatpush2.xpose.msra.mxu0 0.0
    %405 = vmatprep.subr.mxu0 0.0
    %406 = vmatpush2.xpose.msra.mxu0 0.0
    %407 = vmatprep.subr.mxu0 0.0
    %408 = vmatpush2.xpose.msra.mxu0 0.0
    %409 = vmatprep.subr.mxu0 0.0
    %410 = vmatpush2.xpose.msra.mxu0 0.0
    %411 = vmatprep.subr.mxu0 0.0
    %412 = vmatpush2.xpose.msra.mxu0 0.0
    %413 = vmatprep.subr.mxu0 0.0
    %414 = vmatpush2.xpose.msra.mxu0 0.0
    %415 = vmatprep.subr.mxu0 0.0
    %416 = vmatpush2.xpose.msra.mxu0 0.0
    %417 = vmatprep.subr.mxu0 0.0
    %418 = vmatpush2.xpose.msra.mxu0 0.0
    %419 = vmatprep.subr.mxu0 0.0
    %420 = vmatpush2.xpose.msra.mxu0 0.0
    %421 = vmatprep.subr.mxu0 0.0
    %422 = vmatpush2.xpose.msra.mxu0 0.0
    %423 = vmatprep.subr.mxu0 0.0
    %424 = vmatpush2.xpose.msra.mxu0 0.0
    %425 = vmatprep.mubr.f32.mxu0 0.0
    %426 = vmatmul.mubr.f32.gmra.mxu0 %v345
    %v427 = vpop.f32.mrf.mxu0
    %v428 = vadd.f32 %v223, %v427
    %v429 = vpop.f32.mrf.mxu0
    %430 = vmatprep.mubr.f32.mxu0 0.0
    %431 = vmatmul.mubr.f32.gmra.mxu0 %v347
    %v432 = vpop.f32.mrf.mxu0
    %v433 = vadd.f32 %v224, %v432
    %v434 = vpop.f32.mrf.mxu0
    %435 = vmatprep.mubr.f32.mxu0 0.0
    %436 = vmatmul.mubr.f32.gmra.mxu0 %v349
    %v437 = vpop.f32.mrf.mxu0
    %v438 = vadd.f32 %v225, %v437
    %v439 = vpop.f32.mrf.mxu0
    %440 = vmatprep.mubr.f32.mxu0 0.0
    %441 = vmatmul.mubr.f32.gmra.mxu0 %v351
    %v442 = vpop.f32.mrf.mxu0
    %v443 = vadd.f32 %v226, %v442
    %v444 = vpop.f32.mrf.mxu0
    %445 = vdwg.mxu0
    %v446 = vsel %vm52, %v319, -inf
    %447 = vmax.xlane.f32.xlu0 %v446
    %v448 = vpop.xlane.xlu0 %447
    %v449 = vsel %vm52, %v324, -inf
    %450 = vmax.xlane.f32.xlu0 %v449
    %v451 = vpop.xlane.xlu0 %450
    %v452 = vsel %vm52, %v329, -inf
    %453 = vmax.xlane.f32.xlu0 %v452
    %v454 = vpop.xlane.xlu0 %453
    %v455 = vsel %vm52, %v334, -inf
    %456 = vmax.xlane.f32.xlu0 %v455
    %v457 = vpop.xlane.xlu0 %456
    %v458 = vsel %vm52, %v428, -inf
    %459 = vmax.xlane.f32.xlu0 %v458
    %v460 = vpop.xlane.xlu0 %459
    %v461 = vsel %vm52, %v433, -inf
    %462 = vmax.xlane.f32.xlu0 %v461
    %v463 = vpop.xlane.xlu0 %462
    %v464 = vsel %vm52, %v438, -inf
    %465 = vmax.xlane.f32.xlu0 %v464
    %v466 = vpop.xlane.xlu0 %465
    %v467 = vsel %vm52, %v443, -inf
    %468 = vmax.xlane.f32.xlu0 %v467
    %v469 = vpop.xlane.xlu0 %468
    %v470 = vsub.f32 %v319, %v448
    %v471 = vsub.f32 %v324, %v451
    %v472 = vsub.f32 %v329, %v454
    %v473 = vsub.f32 %v334, %v457
    %v474 = vsub.f32 %v428, %v460
    %v475 = vsub.f32 %v433, %v463
    %v476 = vsub.f32 %v438, %v466
    %v477 = vsub.f32 %v443, %v469
    %v478 = vmul.f32 %v470, 1.442695
    %v479 = vpow.pop %v478
    %v480 = vmul.f32 %v471, 1.442695
    %v481 = vpow.pop %v480
    %v482 = vmul.f32 %v472, 1.442695
    %v483 = vpow.pop %v482
    %v484 = vmul.f32 %v473, 1.442695
    %v485 = vpow.pop %v484
    %v486 = vmul.f32 %v474, 1.442695
    %v487 = vpow.pop %v486
    %v488 = vmul.f32 %v475, 1.442695
    %v489 = vpow.pop %v488
    %v490 = vmul.f32 %v476, 1.442695
    %v491 = vpow.pop %v490
    %v492 = vmul.f32 %v477, 1.442695
    %v493 = vpow.pop %v492
    %v494 = vsel %vm52, %v479, 0.0
    %495 = vadd.xlane.f32.xlu0 %v494
    %v496 = vpop.xlane.xlu0 %495
    %v497 = vsel %vm52, %v481, 0.0
    %498 = vadd.xlane.f32.xlu0 %v497
    %v499 = vpop.xlane.xlu0 %498
    %v500 = vsel %vm52, %v483, 0.0
    %501 = vadd.xlane.f32.xlu0 %v500
    %v502 = vpop.xlane.xlu0 %501
    %v503 = vsel %vm52, %v485, 0.0
    %504 = vadd.xlane.f32.xlu0 %v503
    %v505 = vpop.xlane.xlu0 %504
    %v506 = vsel %vm52, %v487, 0.0
    %507 = vadd.xlane.f32.xlu0 %v506
    %v508 = vpop.xlane.xlu0 %507
    %v509 = vsel %vm52, %v489, 0.0
    %510 = vadd.xlane.f32.xlu0 %v509
    %v511 = vpop.xlane.xlu0 %510
    %v512 = vsel %vm52, %v491, 0.0
    %513 = vadd.xlane.f32.xlu0 %v512
    %v514 = vpop.xlane.xlu0 %513
    %v515 = vsel %vm52, %v493, 0.0
    %516 = vadd.xlane.f32.xlu0 %v515
    %v517 = vpop.xlane.xlu0 %516
    %v518 = vrcp.pop %v496
    %v519 = vrcp.pop %v499
    %v520 = vrcp.pop %v502
    %v521 = vrcp.pop %v505
    %v522 = vrcp.pop %v508
    %v523 = vrcp.pop %v511
    %v524 = vrcp.pop %v514
    %v525 = vrcp.pop %v517
    %v526 = vmul.f32 %v496, %v518
    %v527 = vmul.f32 %v499, %v519
    %v528 = vmul.f32 %v502, %v520
    %v529 = vmul.f32 %v505, %v521
    %v530 = vmul.f32 %v508, %v522
    %v531 = vmul.f32 %v511, %v523
    %v532 = vmul.f32 %v514, %v524
    %v533 = vmul.f32 %v517, %v525
    %v534 = vsub.f32 2.0, %v526
    %v535 = vsub.f32 2.0, %v527
    %v536 = vsub.f32 2.0, %v528
    %v537 = vsub.f32 2.0, %v529
    %v538 = vsub.f32 2.0, %v530
    %v539 = vsub.f32 2.0, %v531
    %v540 = vsub.f32 2.0, %v532
    %v541 = vsub.f32 2.0, %v533
    %v542 = vmul.f32 %v518, %v534
    %v543 = vmul.f32 %v519, %v535
    %v544 = vmul.f32 %v520, %v536
    %v545 = vmul.f32 %v521, %v537
    %v546 = vmul.f32 %v522, %v538
    %v547 = vmul.f32 %v523, %v539
    %v548 = vmul.f32 %v524, %v540
    %v549 = vmul.f32 %v525, %v541
    %v550 = vmul.f32 %v479, %v542
    %v551 = vmul.f32 %v481, %v543
    %v552 = vmul.f32 %v483, %v544
    %v553 = vmul.f32 %v485, %v545
    %v554 = vmul.f32 %v487, %v546
    %v555 = vmul.f32 %v489, %v547
    %v556 = vmul.f32 %v491, %v548
    %v557 = vmul.f32 %v493, %v549
    %558 = vrot.lane.b32.xlu0 %v201, 64
    %v559 = vpop.permute.xlu0 %558
    %560 = vrot.lane.b32.xlu0 %v212, 64
    %v561 = vpop.permute.xlu0 %560
    %562 = vrot.lane.b32.xlu0 %v216, 64
    %v563 = vpop.permute.xlu0 %562
    %564 = vrot.lane.b32.xlu0 %v220, 64
    %v565 = vpop.permute.xlu0 %564
    %v571 = vsel %vm52, %v550, 0
    %v574 = vsel %vm52, %v551, 0
    %v577 = vsel %vm52, %v552, 0
    %v580 = vsel %vm52, %v553, 0
    %582 = vmatprep.subr.mxu0 0.0
    %583 = vmatpush1.msra.mxu0 0.0
    %584 = vmatprep.subr.mxu0 0.0
    %585 = vmatpush1.msra.mxu0 0.0
    %586 = vmatprep.subr.mxu0 0.0
    %587 = vmatpush1.msra.mxu0 0.0
    %588 = vmatprep.subr.mxu0 0.0
    %589 = vmatpush1.msra.mxu0 0.0
    %590 = vmatprep.subr.mxu0 0.0
    %591 = vmatpush1.msra.mxu0 0.0
    %592 = vmatprep.subr.mxu0 0.0
    %593 = vmatpush1.msra.mxu0 0.0
    %594 = vmatprep.subr.mxu0 0.0
    %595 = vmatpush1.msra.mxu0 0.0
    %596 = vmatprep.subr.mxu0 0.0
    %597 = vmatpush1.msra.mxu0 0.0
    %598 = vmatprep.subr.mxu0 0.0
    %599 = vmatpush1.msra.mxu0 0.0
    %600 = vmatprep.subr.mxu0 0.0
    %601 = vmatpush1.msra.mxu0 0.0
    %602 = vmatprep.subr.mxu0 0.0
    %603 = vmatpush1.msra.mxu0 0.0
    %604 = vmatprep.subr.mxu0 0.0
    %605 = vmatpush1.msra.mxu0 0.0
    %606 = vmatprep.subr.mxu0 0.0
    %607 = vmatpush1.msra.mxu0 %v565
    %608 = vmatprep.subr.mxu0 0.0
    %609 = vmatpush1.msra.mxu0 %v563
    %610 = vmatprep.subr.mxu0 0.0
    %611 = vmatpush1.msra.mxu0 %v561
    %612 = vmatprep.subr.mxu0 0.0
    %613 = vmatpush1.msra.mxu0 %v559
    %614 = vmatprep.subr.mxu0 0.0
    %615 = vmatpush2.msra.mxu0 0.0
    %616 = vmatprep.subr.mxu0 0.0
    %617 = vmatpush2.msra.mxu0 0.0
    %618 = vmatprep.subr.mxu0 0.0
    %619 = vmatpush2.msra.mxu0 0.0
    %620 = vmatprep.subr.mxu0 0.0
    %621 = vmatpush2.msra.mxu0 0.0
    %622 = vmatprep.subr.mxu0 0.0
    %623 = vmatpush2.msra.mxu0 0.0
    %624 = vmatprep.subr.mxu0 0.0
    %625 = vmatpush2.msra.mxu0 0.0
    %626 = vmatprep.subr.mxu0 0.0
    %627 = vmatpush2.msra.mxu0 0.0
    %628 = vmatprep.subr.mxu0 0.0
    %629 = vmatpush2.msra.mxu0 0.0
    %630 = vmatprep.subr.mxu0 0.0
    %631 = vmatpush2.msra.mxu0 0.0
    %632 = vmatprep.subr.mxu0 0.0
    %633 = vmatpush2.msra.mxu0 0.0
    %634 = vmatprep.subr.mxu0 0.0
    %635 = vmatpush2.msra.mxu0 0.0
    %636 = vmatprep.subr.mxu0 0.0
    %637 = vmatpush2.msra.mxu0 0.0
    %638 = vmatprep.subr.mxu0 0.0
    %639 = vmatpush2.msra.mxu0 0.0
    %640 = vmatprep.subr.mxu0 0.0
    %641 = vmatpush2.msra.mxu0 0.0
    %642 = vmatprep.subr.mxu0 0.0
    %643 = vmatpush2.msra.mxu0 0.0
    %644 = vmatprep.subr.mxu0 0.0
    %645 = vmatpush2.msra.mxu0 0.0
    %646 = vmatprep.mubr.f32.mxu0 0.0
    %647 = vmatmul.mubr.f32.gmra.mxu0 %v571
    %v648 = vpop.f32.mrf.mxu0
    %v649 = vadd.f32 0.0, %v648
    %v650 = vpop.f32.mrf.mxu0
    %651 = vmatprep.mubr.f32.mxu0 0.0
    %652 = vmatmul.mubr.f32.gmra.mxu0 %v574
    %v653 = vpop.f32.mrf.mxu0
    %v654 = vadd.f32 0.0, %v653
    %v655 = vpop.f32.mrf.mxu0
    %656 = vmatprep.mubr.f32.mxu0 0.0
    %657 = vmatmul.mubr.f32.gmra.mxu0 %v577
    %v658 = vpop.f32.mrf.mxu0
    %v659 = vadd.f32 0.0, %v658
    %v660 = vpop.f32.mrf.mxu0
    %661 = vmatprep.mubr.f32.mxu0 0.0
    %662 = vmatmul.mubr.f32.gmra.mxu0 %v580
    %v663 = vpop.f32.mrf.mxu0
    %v664 = vadd.f32 0.0, %v663
    %v665 = vpop.f32.mrf.mxu0
    %666 = vdwg.mxu0
    %667 = vrot.lane.b32.xlu0 %v206, 64
    %v668 = vpop.permute.xlu0 %667
    %669 = vrot.lane.b32.xlu0 %v214, 64
    %v670 = vpop.permute.xlu0 %669
    %671 = vrot.lane.b32.xlu0 %v218, 64
    %v672 = vpop.permute.xlu0 %671
    %673 = vrot.lane.b32.xlu0 %v222, 64
    %v674 = vpop.permute.xlu0 %673
    %v680 = vsel %vm52, %v554, 0
    %v683 = vsel %vm52, %v555, 0
    %v686 = vsel %vm52, %v556, 0
    %v689 = vsel %vm52, %v557, 0
    %691 = vmatprep.subr.mxu0 0.0
    %692 = vmatpush1.msra.mxu0 0.0
    %693 = vmatprep.subr.mxu0 0.0
    %694 = vmatpush1.msra.mxu0 0.0
    %695 = vmatprep.subr.mxu0 0.0
    %696 = vmatpush1.msra.mxu0 0.0
    %697 = vmatprep.subr.mxu0 0.0
    %698 = vmatpush1.msra.mxu0 0.0
    %699 = vmatprep.subr.mxu0 0.0
    %700 = vmatpush1.msra.mxu0 0.0
    %701 = vmatprep.subr.mxu0 0.0
    %702 = vmatpush1.msra.mxu0 0.0
    %703 = vmatprep.subr.mxu0 0.0
    %704 = vmatpush1.msra.mxu0 0.0
    %705 = vmatprep.subr.mxu0 0.0
    %706 = vmatpush1.msra.mxu0 0.0
    %707 = vmatprep.subr.mxu0 0.0
    %708 = vmatpush1.msra.mxu0 0.0
    %709 = vmatprep.subr.mxu0 0.0
    %710 = vmatpush1.msra.mxu0 0.0
    %711 = vmatprep.subr.mxu0 0.0
    %712 = vmatpush1.msra.mxu0 0.0
    %713 = vmatprep.subr.mxu0 0.0
    %714 = vmatpush1.msra.mxu0 0.0
    %715 = vmatprep.subr.mxu0 0.0
    %716 = vmatpush1.msra.mxu0 %v674
    %717 = vmatprep.subr.mxu0 0.0
    %718 = vmatpush1.msra.mxu0 %v672
    %719 = vmatprep.subr.mxu0 0.0
    %720 = vmatpush1.msra.mxu0 %v670
    %721 = vmatprep.subr.mxu0 0.0
    %722 = vmatpush1.msra.mxu0 %v668
    %723 = vmatprep.subr.mxu0 0.0
    %724 = vmatpush2.msra.mxu0 0.0
    %725 = vmatprep.subr.mxu0 0.0
    %726 = vmatpush2.msra.mxu0 0.0
    %727 = vmatprep.subr.mxu0 0.0
    %728 = vmatpush2.msra.mxu0 0.0
    %729 = vmatprep.subr.mxu0 0.0
    %730 = vmatpush2.msra.mxu0 0.0
    %731 = vmatprep.subr.mxu0 0.0
    %732 = vmatpush2.msra.mxu0 0.0
    %733 = vmatprep.subr.mxu0 0.0
    %734 = vmatpush2.msra.mxu0 0.0
    %735 = vmatprep.subr.mxu0 0.0
    %736 = vmatpush2.msra.mxu0 0.0
    %737 = vmatprep.subr.mxu0 0.0
    %738 = vmatpush2.msra.mxu0 0.0
    %739 = vmatprep.subr.mxu0 0.0
    %740 = vmatpush2.msra.mxu0 0.0
    %741 = vmatprep.subr.mxu0 0.0
    %742 = vmatpush2.msra.mxu0 0.0
    %743 = vmatprep.subr.mxu0 0.0
    %744 = vmatpush2.msra.mxu0 0.0
    %745 = vmatprep.subr.mxu0 0.0
    %746 = vmatpush2.msra.mxu0 0.0
    %747 = vmatprep.subr.mxu0 0.0
    %748 = vmatpush2.msra.mxu0 0.0
    %749 = vmatprep.subr.mxu0 0.0
    %750 = vmatpush2.msra.mxu0 0.0
    %751 = vmatprep.subr.mxu0 0.0
    %752 = vmatpush2.msra.mxu0 0.0
    %753 = vmatprep.subr.mxu0 0.0
    %754 = vmatpush2.msra.mxu0 0.0
    %755 = vmatprep.mubr.f32.mxu0 0.0
    %756 = vmatmul.mubr.f32.gmra.mxu0 %v680
    %v757 = vpop.f32.mrf.mxu0
    %v758 = vadd.f32 0.0, %v757
    %v759 = vpop.f32.mrf.mxu0
    %760 = vmatprep.mubr.f32.mxu0 0.0
    %761 = vmatmul.mubr.f32.gmra.mxu0 %v683
    %v762 = vpop.f32.mrf.mxu0
    %v763 = vadd.f32 0.0, %v762
    %v764 = vpop.f32.mrf.mxu0
    %765 = vmatprep.mubr.f32.mxu0 0.0
    %766 = vmatmul.mubr.f32.gmra.mxu0 %v686
    %v767 = vpop.f32.mrf.mxu0
    %v768 = vadd.f32 0.0, %v767
    %v769 = vpop.f32.mrf.mxu0
    %770 = vmatprep.mubr.f32.mxu0 0.0
    %771 = vmatmul.mubr.f32.gmra.mxu0 %v689
    %v772 = vpop.f32.mrf.mxu0
    %v773 = vadd.f32 0.0, %v772
    %v774 = vpop.f32.mrf.mxu0
    %775 = vdwg.mxu0
    %778 = vrot.lane.b32.xlu0 %v654, 8
    %v779 = vpop.permute.xlu0 %778
    %780 = vrot.lane.b32.xlu0 %v763, 8
    %v781 = vpop.permute.xlu0 %780
    %786 = vrot.lane.b32.xlu0 %v659, 16
    %v787 = vpop.permute.xlu0 %786
    %788 = vrot.lane.b32.xlu0 %v768, 16
    %v789 = vpop.permute.xlu0 %788
    %794 = vrot.lane.b32.xlu0 %v664, 24
    %v795 = vpop.permute.xlu0 %794
    %796 = vrot.lane.b32.xlu0 %v773, 24
    %v797 = vpop.permute.xlu0 %796
    %v800 = vsel %vm235, %v649, %v779
    %v801 = vsel %vm235, %v758, %v781
    %vm802 = vcmask 130048
    %v803 = vsel %vm802, %v800, %v787
    %v804 = vsel %vm802, %v801, %v789
    %vm805 = vcmask 195584
    %v806 = vsel %vm805, %v803, %v795
    %v807 = vsel %vm805, %v804, %v797
    %v808 = vld [vmem:[%s5] sm:$0xff]
    %v809 = vld [vmem:[%s5 + $0x8] sm:$0xff]
    %v810 = vld [vmem:[%s5 + $0x10] sm:$0xff]
    %v811 = vld [vmem:[%s5 + $0x18] sm:$0xff]
    %v813 = vsel %vm52, %v806, 0
    %v816 = vsel %vm52, %v807, 0
    %818 = vmatprep.subr.mxu0 0.0
    %819 = vmatpush1.msra.mxu0 0.0
    %820 = vmatprep.subr.mxu0 0.0
    %821 = vmatpush1.msra.mxu0 0.0
    %822 = vmatprep.subr.mxu0 0.0
    %823 = vmatpush1.msra.mxu0 0.0
    %824 = vmatprep.subr.mxu0 0.0
    %825 = vmatpush1.msra.mxu0 0.0
    %826 = vmatprep.subr.mxu0 0.0
    %827 = vmatpush1.msra.mxu0 0.0
    %828 = vmatprep.subr.mxu0 0.0
    %829 = vmatpush1.msra.mxu0 0.0
    %830 = vmatprep.subr.mxu0 0.0
    %831 = vmatpush1.msra.mxu0 0.0
    %832 = vmatprep.subr.mxu0 0.0
    %833 = vmatpush1.msra.mxu0 0.0
    %834 = vmatprep.subr.mxu0 0.0
    %835 = vmatpush1.msra.mxu0 0.0
    %836 = vmatprep.subr.mxu0 0.0
    %837 = vmatpush1.msra.mxu0 0.0
    %838 = vmatprep.subr.mxu0 0.0
    %839 = vmatpush1.msra.mxu0 0.0
    %840 = vmatprep.subr.mxu0 0.0
    %841 = vmatpush1.msra.mxu0 0.0
    %842 = vmatprep.subr.mxu0 0.0
    %843 = vmatpush1.msra.mxu0 %v811
    %844 = vmatprep.subr.mxu0 0.0
    %845 = vmatpush1.msra.mxu0 %v810
    %846 = vmatprep.subr.mxu0 0.0
    %847 = vmatpush1.msra.mxu0 %v809
    %848 = vmatprep.subr.mxu0 0.0
    %849 = vmatpush1.msra.mxu0 %v808
    %850 = vmatprep.subr.mxu0 0.0
    %851 = vmatpush2.msra.mxu0 0.0
    %852 = vmatprep.subr.mxu0 0.0
    %853 = vmatpush2.msra.mxu0 0.0
    %854 = vmatprep.subr.mxu0 0.0
    %855 = vmatpush2.msra.mxu0 0.0
    %856 = vmatprep.subr.mxu0 0.0
    %857 = vmatpush2.msra.mxu0 0.0
    %858 = vmatprep.subr.mxu0 0.0
    %859 = vmatpush2.msra.mxu0 0.0
    %860 = vmatprep.subr.mxu0 0.0
    %861 = vmatpush2.msra.mxu0 0.0
    %862 = vmatprep.subr.mxu0 0.0
    %863 = vmatpush2.msra.mxu0 0.0
    %864 = vmatprep.subr.mxu0 0.0
    %865 = vmatpush2.msra.mxu0 0.0
    %866 = vmatprep.subr.mxu0 0.0
    %867 = vmatpush2.msra.mxu0 0.0
    %868 = vmatprep.subr.mxu0 0.0
    %869 = vmatpush2.msra.mxu0 0.0
    %870 = vmatprep.subr.mxu0 0.0
    %871 = vmatpush2.msra.mxu0 0.0
    %872 = vmatprep.subr.mxu0 0.0
    %873 = vmatpush2.msra.mxu0 0.0
    %874 = vmatprep.subr.mxu0 0.0
    %875 = vmatpush2.msra.mxu0 0.0
    %876 = vmatprep.subr.mxu0 0.0
    %877 = vmatpush2.msra.mxu0 0.0
    %878 = vmatprep.subr.mxu0 0.0
    %879 = vmatpush2.msra.mxu0 0.0
    %880 = vmatprep.subr.mxu0 0.0
    %881 = vmatpush2.msra.mxu0 0.0
    %882 = vmatprep.mubr.f32.mxu0 0.0
    %883 = vmatmul.mubr.f32.gmra.mxu0 %v813
    %v884 = vpop.f32.mrf.mxu0
    %v885 = vadd.f32 0.0, %v884
    %v886 = vpop.f32.mrf.mxu0
    %887 = vmatprep.mubr.f32.mxu0 0.0
    %888 = vmatmul.mubr.f32.gmra.mxu0 %v816
    %v889 = vpop.f32.mrf.mxu0
    %v890 = vadd.f32 0.0, %v889
    %v891 = vpop.f32.mrf.mxu0
    %892 = vdwg.mxu0
    %v893 = vadd.f32 %v48, %v885
    %v894 = vadd.f32 %v49, %v890
    %v895 = vld [vmem:[%s6] sm:$0x1]
    %v897 = vlaneseq
    %v898 = vshrl.u32 %v897, 7
    %v899 = vsub.s32 0, %v898
    %v900 = vrot.slane %v895, %v899
    %v902 = vadd.f32 %v893, %v900
    %v903 = vadd.f32 %v894, %v900
    %v904 = vld [vmem:[%s7] sm:$0x1]
    %v905 = vld [vmem:[%s8] sm:$0x1]
    %v906 = vsel %vm52, %v902, 0.0
    %907 = vadd.xlane.f32.xlu0 %v906
    %v908 = vpop.xlane.xlu0 %907
    %v909 = vsel %vm52, %v903, 0.0
    %910 = vadd.xlane.f32.xlu0 %v909
    %v911 = vpop.xlane.xlu0 %910
    %v912 = vmul.f32 %v908, %v59
    %v913 = vmul.f32 %v911, %v59
    %v914 = vsub.f32 %v902, %v912
    %v915 = vsub.f32 %v903, %v913
    %v916 = vmul.f32 %v914, %v914
    %v917 = vmul.f32 %v915, %v915
    %v918 = vsel %vm52, %v916, 0.0
    %919 = vadd.xlane.f32.xlu0 %v918
    %v920 = vpop.xlane.xlu0 %919
    %v921 = vsel %vm52, %v917, 0.0
    %922 = vadd.xlane.f32.xlu0 %v921
    %v923 = vpop.xlane.xlu0 %922
    %v924 = vmul.f32 %v920, %v72
    %v925 = vmul.f32 %v923, %v72
    %v926 = vrsqrt.pop %v924
    %v927 = vmul.f32 %v924, %v926
    %vm928 = vcmp.eq.f32.partialorder %v924, inf
    %v929 = vsel %vm928, %v924, %v927
    %vm930 = vcmp.eq.f32.partialorder %v924, 0.0
    %v931 = vand.u32 %v924, 2147483648
    %v932 = vsel %vm930, %v931, %v929
    %v933 = vrsqrt.pop %v925
    %v934 = vmul.f32 %v925, %v933
    %vm935 = vcmp.eq.f32.partialorder %v925, inf
    %v936 = vsel %vm935, %v925, %v934
    %vm937 = vcmp.eq.f32.partialorder %v925, 0.0
    %v938 = vand.u32 %v925, 2147483648
    %v939 = vsel %vm937, %v938, %v936
    %v940 = vadd.f32 %v932, 1e-06
    %v941 = vadd.f32 %v939, 1e-06
    %v942 = vrcp.pop %v940
    %v943 = vrcp.pop %v941
    %v944 = vmul.f32 %v940, %v942
    %v945 = vmul.f32 %v941, %v943
    %v946 = vsub.f32 2.0, %v944
    %v947 = vsub.f32 2.0, %v945
    %v948 = vmul.f32 %v942, %v946
    %v949 = vmul.f32 %v943, %v947
    %v951 = vlaneseq
    %v952 = vshrl.u32 %v951, 7
    %v953 = vsub.s32 0, %v952
    %v954 = vrot.slane %v904, %v953
    %v956 = vmul.f32 %v954, %v914
    %v957 = vmul.f32 %v954, %v915
    %v958 = vmul.f32 %v956, %v948
    %v959 = vmul.f32 %v957, %v949
    %v961 = vlaneseq
    %v962 = vshrl.u32 %v961, 7
    %v963 = vsub.s32 0, %v962
    %v964 = vrot.slane %v905, %v963
    %v966 = vadd.f32 %v958, %v964
    %v967 = vadd.f32 %v959, %v964
    %v968 = vld [vmem:[%s9] sm:$0xff]
    %v969 = vld [vmem:[%s9 + $0x8] sm:$0xff]
    %v970 = vld [vmem:[%s9 + $0x10] sm:$0xff]
    %v971 = vld [vmem:[%s9 + $0x18] sm:$0xff]
    %v972 = vld [vmem:[%s10] sm:$0x1]
    %v974 = vlaneseq
    %v975 = vshrl.u32 %v974, 7
    %v976 = vsub.s32 0, %v975
    %v977 = vrot.slane %v972, %v976
    %v980 = vsel %vm52, %v966, 0
    %v983 = vsel %vm52, %v967, 0
    %985 = vmatprep.subr.mxu0 0.0
    %986 = vmatpush1.msra.mxu0 0.0
    %987 = vmatprep.subr.mxu0 0.0
    %988 = vmatpush1.msra.mxu0 0.0
    %989 = vmatprep.subr.mxu0 0.0
    %990 = vmatpush1.msra.mxu0 0.0
    %991 = vmatprep.subr.mxu0 0.0
    %992 = vmatpush1.msra.mxu0 0.0
    %993 = vmatprep.subr.mxu0 0.0
    %994 = vmatpush1.msra.mxu0 0.0
    %995 = vmatprep.subr.mxu0 0.0
    %996 = vmatpush1.msra.mxu0 0.0
    %997 = vmatprep.subr.mxu0 0.0
    %998 = vmatpush1.msra.mxu0 0.0
    %999 = vmatprep.subr.mxu0 0.0
    %1000 = vmatpush1.msra.mxu0 0.0
    %1001 = vmatprep.subr.mxu0 0.0
    %1002 = vmatpush1.msra.mxu0 0.0
    %1003 = vmatprep.subr.mxu0 0.0
    %1004 = vmatpush1.msra.mxu0 0.0
    %1005 = vmatprep.subr.mxu0 0.0
    %1006 = vmatpush1.msra.mxu0 0.0
    %1007 = vmatprep.subr.mxu0 0.0
    %1008 = vmatpush1.msra.mxu0 0.0
    %1009 = vmatprep.subr.mxu0 0.0
    %1010 = vmatpush1.msra.mxu0 %v971
    %1011 = vmatprep.subr.mxu0 0.0
    %1012 = vmatpush1.msra.mxu0 %v970
    %1013 = vmatprep.subr.mxu0 0.0
    %1014 = vmatpush1.msra.mxu0 %v969
    %1015 = vmatprep.subr.mxu0 0.0
    %1016 = vmatpush1.msra.mxu0 %v968
    %1017 = vmatprep.subr.mxu0 0.0
    %1018 = vmatpush2.msra.mxu0 0.0
    %1019 = vmatprep.subr.mxu0 0.0
    %1020 = vmatpush2.msra.mxu0 0.0
    %1021 = vmatprep.subr.mxu0 0.0
    %1022 = vmatpush2.msra.mxu0 0.0
    %1023 = vmatprep.subr.mxu0 0.0
    %1024 = vmatpush2.msra.mxu0 0.0
    %1025 = vmatprep.subr.mxu0 0.0
    %1026 = vmatpush2.msra.mxu0 0.0
    %1027 = vmatprep.subr.mxu0 0.0
    %1028 = vmatpush2.msra.mxu0 0.0
    %1029 = vmatprep.subr.mxu0 0.0
    %1030 = vmatpush2.msra.mxu0 0.0
    %1031 = vmatprep.subr.mxu0 0.0
    %1032 = vmatpush2.msra.mxu0 0.0
    %1033 = vmatprep.subr.mxu0 0.0
    %1034 = vmatpush2.msra.mxu0 0.0
    %1035 = vmatprep.subr.mxu0 0.0
    %1036 = vmatpush2.msra.mxu0 0.0
    %1037 = vmatprep.subr.mxu0 0.0
    %1038 = vmatpush2.msra.mxu0 0.0
    %1039 = vmatprep.subr.mxu0 0.0
    %1040 = vmatpush2.msra.mxu0 0.0
    %1041 = vmatprep.subr.mxu0 0.0
    %1042 = vmatpush2.msra.mxu0 0.0
    %1043 = vmatprep.subr.mxu0 0.0
    %1044 = vmatpush2.msra.mxu0 0.0
    %1045 = vmatprep.subr.mxu0 0.0
    %1046 = vmatpush2.msra.mxu0 0.0
    %1047 = vmatprep.subr.mxu0 0.0
    %1048 = vmatpush2.msra.mxu0 0.0
    %1049 = vmatprep.mubr.f32.mxu0 0.0
    %1050 = vmatmul.mubr.f32.gmra.mxu0 %v980
    %v1051 = vpop.f32.mrf.mxu0
    %v1052 = vadd.f32 %v977, %v1051
    %v1053 = vpop.f32.mrf.mxu0
    %1054 = vmatprep.mubr.f32.mxu0 0.0
    %1055 = vmatmul.mubr.f32.gmra.mxu0 %v983
    %v1056 = vpop.f32.mrf.mxu0
    %v1057 = vadd.f32 %v977, %v1056
    %v1058 = vpop.f32.mrf.mxu0
    %1059 = vdwg.mxu0
    %v1060 = vmax.f32 %v1052, 0.0
    %v1061 = vmax.f32 %v1057, 0.0
    %v1062 = vld [vmem:[%s11] sm:$0xff]
    %v1063 = vld [vmem:[%s11 + $0x8] sm:$0xff]
    %v1064 = vld [vmem:[%s11 + $0x10] sm:$0xff]
    %v1065 = vld [vmem:[%s11 + $0x18] sm:$0xff]
    %v1066 = vld [vmem:[%s11 + $0x20] sm:$0xff]
    %v1067 = vld [vmem:[%s11 + $0x28] sm:$0xff]
    %v1068 = vld [vmem:[%s11 + $0x30] sm:$0xff]
    %v1069 = vld [vmem:[%s11 + $0x38] sm:$0xff]
    %v1070 = vld [vmem:[%s11 + $0x40] sm:$0xff]
    %v1071 = vld [vmem:[%s11 + $0x48] sm:$0xff]
    %v1072 = vld [vmem:[%s11 + $0x50] sm:$0xff]
    %v1073 = vld [vmem:[%s11 + $0x58] sm:$0xff]
    %v1074 = vld [vmem:[%s11 + $0x60] sm:$0xff]
    %v1075 = vld [vmem:[%s11 + $0x68] sm:$0xff]
    %v1076 = vld [vmem:[%s11 + $0x70] sm:$0xff]
    %v1077 = vld [vmem:[%s11 + $0x78] sm:$0xff]
    %v1078 = vld [vmem:[%s12] sm:$0x1]
    %v1080 = vlaneseq
    %v1081 = vshrl.u32 %v1080, 7
    %v1082 = vsub.s32 0, %v1081
    %v1083 = vrot.slane %v1078, %v1082
    %1085 = vmatprep.subr.mxu0 0.0
    %1086 = vmatpush1.msra.mxu0 %v1077
    %1087 = vmatprep.subr.mxu0 0.0
    %1088 = vmatpush1.msra.mxu0 %v1076
    %1089 = vmatprep.subr.mxu0 0.0
    %1090 = vmatpush1.msra.mxu0 %v1075
    %1091 = vmatprep.subr.mxu0 0.0
    %1092 = vmatpush1.msra.mxu0 %v1074
    %1093 = vmatprep.subr.mxu0 0.0
    %1094 = vmatpush1.msra.mxu0 %v1073
    %1095 = vmatprep.subr.mxu0 0.0
    %1096 = vmatpush1.msra.mxu0 %v1072
    %1097 = vmatprep.subr.mxu0 0.0
    %1098 = vmatpush1.msra.mxu0 %v1071
    %1099 = vmatprep.subr.mxu0 0.0
    %1100 = vmatpush1.msra.mxu0 %v1070
    %1101 = vmatprep.subr.mxu0 0.0
    %1102 = vmatpush1.msra.mxu0 %v1069
    %1103 = vmatprep.subr.mxu0 0.0
    %1104 = vmatpush1.msra.mxu0 %v1068
    %1105 = vmatprep.subr.mxu0 0.0
    %1106 = vmatpush1.msra.mxu0 %v1067
    %1107 = vmatprep.subr.mxu0 0.0
    %1108 = vmatpush1.msra.mxu0 %v1066
    %1109 = vmatprep.subr.mxu0 0.0
    %1110 = vmatpush1.msra.mxu0 %v1065
    %1111 = vmatprep.subr.mxu0 0.0
    %1112 = vmatpush1.msra.mxu0 %v1064
    %1113 = vmatprep.subr.mxu0 0.0
    %1114 = vmatpush1.msra.mxu0 %v1063
    %1115 = vmatprep.subr.mxu0 0.0
    %1116 = vmatpush1.msra.mxu0 %v1062
    %1117 = vmatprep.subr.mxu0 0.0
    %1118 = vmatpush2.msra.mxu0 0.0
    %1119 = vmatprep.subr.mxu0 0.0
    %1120 = vmatpush2.msra.mxu0 0.0
    %1121 = vmatprep.subr.mxu0 0.0
    %1122 = vmatpush2.msra.mxu0 0.0
    %1123 = vmatprep.subr.mxu0 0.0
    %1124 = vmatpush2.msra.mxu0 0.0
    %1125 = vmatprep.subr.mxu0 0.0
    %1126 = vmatpush2.msra.mxu0 0.0
    %1127 = vmatprep.subr.mxu0 0.0
    %1128 = vmatpush2.msra.mxu0 0.0
    %1129 = vmatprep.subr.mxu0 0.0
    %1130 = vmatpush2.msra.mxu0 0.0
    %1131 = vmatprep.subr.mxu0 0.0
    %1132 = vmatpush2.msra.mxu0 0.0
    %1133 = vmatprep.subr.mxu0 0.0
    %1134 = vmatpush2.msra.mxu0 0.0
    %1135 = vmatprep.subr.mxu0 0.0
    %1136 = vmatpush2.msra.mxu0 0.0
    %1137 = vmatprep.subr.mxu0 0.0
    %1138 = vmatpush2.msra.mxu0 0.0
    %1139 = vmatprep.subr.mxu0 0.0
    %1140 = vmatpush2.msra.mxu0 0.0
    %1141 = vmatprep.subr.mxu0 0.0
    %1142 = vmatpush2.msra.mxu0 0.0
    %1143 = vmatprep.subr.mxu0 0.0
    %1144 = vmatpush2.msra.mxu0 0.0
    %1145 = vmatprep.subr.mxu0 0.0
    %1146 = vmatpush2.msra.mxu0 0.0
    %1147 = vmatprep.subr.mxu0 0.0
    %1148 = vmatpush2.msra.mxu0 0.0
    %1149 = vmatprep.mubr.f32.mxu0 0.0
    %1150 = vmatmul.mubr.f32.gmra.mxu0 %v1060
    %v1151 = vpop.f32.mrf.mxu0
    %v1152 = vadd.f32 %v1083, %v1151
    %v1153 = vpop.f32.mrf.mxu0
    %1154 = vmatprep.mubr.f32.mxu0 0.0
    %1155 = vmatmul.mubr.f32.gmra.mxu0 %v1061
    %v1156 = vpop.f32.mrf.mxu0
    %v1157 = vadd.f32 %v1083, %v1156
    %v1158 = vpop.f32.mrf.mxu0
    %1159 = vdwg.mxu0
    %v1160 = vadd.f32 %v902, %v1152
    %v1161 = vadd.f32 %v903, %v1157
    %1162 = vst.msk [vmem:[#allocation2] sm:$0xff] %vm52, %v1160
    %1163 = vst.msk [vmem:[#allocation2 + $0x8] sm:$0xff] %vm52, %v1161
    // Predicated region
    $region58: #{tpu_custom_call.1} parent=1 // pred_check
      _
    $region59: #{tpu_custom_call.1} parent=1 // pred_check_branch
      %1165 = sbr.rel (0) target = $region61
    $region60: #{tpu_custom_call.1} parent=1 // pred_region
      %s1167 = ssub.s32 256, 256
      %1168 = vsyncadd [#allocation3], %s1167
      %s1169 = sshll.u32 [#allocation2], 4
      %s1170 = int_to_ptr.vmem [resolvable:$true] %s1169
      %1175 = dma.vmem_to_hbm [thread:$0]  %s1170, 256, %s14, [#allocation3], 128, 128, 8
    $region61: #{tpu_custom_call.1} parent=1 // pred_fallthru
      _
    // Predicated region
    $region62: #{tpu_custom_call.1} parent=1 // pred_check
      _
    $region63: #{tpu_custom_call.1} parent=1 // pred_check_branch
      %1177 = sbr.rel (0) target = $region65
    $region64: #{tpu_custom_call.1} parent=1 // pred_region
      %1178 = dma.done [#allocation3], 256
    $region65: #{tpu_custom_call.1} parent=1 // pred_fallthru
      _
    %1179 = vsyncpa [#allocation3], 1

</llo_original>
